<compile_context>
chip_gen: v7x
topology: tpu7x:2x2x1
jax: 0.10.0
libtpu: 0.0.40
codegen_flags: <defaults>
</compile_context>

<pallas_src>
import functools

import jax
import jax.numpy as jnp
from jax import lax
from jax.experimental import pallas as pl
from jax.experimental.pallas import tpu as pltpu


def _round_up(x, m):
    return ((x + m - 1) // m) * m


def _sigmoid_f32(x):
    # sigmoid(x) == 0.5*tanh(0.5*x) + 0.5 : single EUP op instead of exp + recip.
    return 0.5 * jnp.tanh(0.5 * x) + 0.5


def _vmem_budget():
    """Generation-aware VMEM (budget, hard-limit clamp) in bytes."""
    try:
        cap = int(getattr(pltpu.get_tpu_info(), "vmem_capacity_bytes", 0))
    except Exception:
        cap = 0
    if cap <= 0:
        cap = 64 << 20              # unknown -> assume smallest generation (v7x)
    budget = int(cap * 0.75)        # path-selection budget (compiler headroom)
    limit_cap = int(cap * 0.90)     # clamp for vmem_limit_bytes
    return budget, limit_cap


# ---------------------------------------------------------------------------
# Kernels
# ---------------------------------------------------------------------------
def _ipd_kernel_resident(zl_ref, zall_ref, adj_ref, *, tn):
    """One (tm, tn) output tile: sigmoid(z[i-block] @ z[j-block].T), resident z."""
    j = pl.program_id(1)
    start = pl.multiple_of(j * tn, tn)
    zr = zall_ref[pl.ds(start, tn), :]               # in-bounds: z is row-padded
    acc = lax.dot_general(
        zl_ref[...], zr,
        dimension_numbers=(((1,), (1,)), ((), ())),  # NT form, no transpose
        preferred_element_type=jnp.float32,
    )
    adj_ref[...] = _sigmoid_f32(acc).astype(adj_ref.dtype)


def _ipd_kernel_stream(zl_ref, zr_ref, adj_ref):
    acc = lax.dot_general(
        zl_ref[...], zr_ref[...],
        dimension_numbers=(((1,), (1,)), ((), ())),
        preferred_element_type=jnp.float32,
    )
    adj_ref[...] = _sigmoid_f32(acc).astype(adj_ref.dtype)


def _ipd_kernel_ktiled(zl_ref, zr_ref, adj_ref, acc_ref):
    k = pl.program_id(2)

    @pl.when(k == 0)
    def _():
        acc_ref[...] = jnp.zeros_like(acc_ref)

    acc_ref[...] += lax.dot_general(
        zl_ref[...], zr_ref[...],
        dimension_numbers=(((1,), (1,)), ((), ())),
        preferred_element_type=jnp.float32,
    )

    @pl.when(k == pl.num_programs(2) - 1)
    def _():
        adj_ref[...] = _sigmoid_f32(acc_ref[...]).astype(adj_ref.dtype)


# ---------------------------------------------------------------------------
# pallas_call builders
# ---------------------------------------------------------------------------
def _call_resident(z_p, n, n_pad, d_pad, tile_n, out_dtype, vmem_limit,
                   single_buffer):
    grid = (n_pad // tile_n, n_pad // tile_n)
    if single_buffer:
        # Constant index_map -> fetched once; a second buffer is pure waste.
        z_all_spec = pl.BlockSpec((n_pad, d_pad), lambda i, j: (0, 0),
                                  pipeline_mode=pl.Buffered(1))
    else:
        z_all_spec = pl.BlockSpec((n_pad, d_pad), lambda i, j: (0, 0))
    return pl.pallas_call(
        functools.partial(_ipd_kernel_resident, tn=tile_n),
        out_shape=jax.ShapeDtypeStruct((n, n), out_dtype),
        grid_spec=pltpu.PrefetchScalarGridSpec(
            num_scalar_prefetch=0,
            grid=grid,
            in_specs=[
                pl.BlockSpec((tile_n, d_pad), lambda i, j: (i, 0)),
                z_all_spec,
            ],
            out_specs=pl.BlockSpec((tile_n, tile_n), lambda i, j: (i, j)),
        ),
        compiler_params=pltpu.CompilerParams(
            dimension_semantics=("parallel", "parallel"),
            vmem_limit_bytes=vmem_limit,
        ),
    )(z_p, z_p)


def _call_stream(z_p, n, n_pad, d_pad, tile_n, out_dtype, vmem_limit):
    grid = (n_pad // tile_n, n_pad // tile_n)
    return pl.pallas_call(
        _ipd_kernel_stream,
        out_shape=jax.ShapeDtypeStruct((n, n), out_dtype),
        grid_spec=pltpu.PrefetchScalarGridSpec(
            num_scalar_prefetch=0,
            grid=grid,
            in_specs=[
                pl.BlockSpec((tile_n, d_pad), lambda i, j: (i, 0)),
                pl.BlockSpec((tile_n, d_pad), lambda i, j: (j, 0)),
            ],
            out_specs=pl.BlockSpec((tile_n, tile_n), lambda i, j: (i, j)),
        ),
        compiler_params=pltpu.CompilerParams(
            dimension_semantics=("parallel", "parallel"),
            vmem_limit_bytes=vmem_limit,
        ),
    )(z_p, z_p)


def _call_ktiled(z_p, n, n_pad, d_pad, tile_n, tile_k, out_dtype, vmem_limit):
    grid = (n_pad // tile_n, n_pad // tile_n, d_pad // tile_k)
    return pl.pallas_call(
        _ipd_kernel_ktiled,
        out_shape=jax.ShapeDtypeStruct((n, n), out_dtype),
        grid_spec=pltpu.PrefetchScalarGridSpec(
            num_scalar_prefetch=0,
            grid=grid,
            in_specs=[
                pl.BlockSpec((tile_n, tile_k), lambda i, j, k: (i, k)),
                pl.BlockSpec((tile_n, tile_k), lambda i, j, k: (j, k)),
            ],
            out_specs=pl.BlockSpec((tile_n, tile_n), lambda i, j, k: (i, j)),
            scratch_shapes=[pltpu.VMEM((tile_n, tile_n), jnp.float32)],
        ),
        compiler_params=pltpu.CompilerParams(
            dimension_semantics=("parallel", "parallel", "arbitrary"),
            vmem_limit_bytes=vmem_limit,
        ),
    )(z_p, z_p)


# ---------------------------------------------------------------------------
# Public wrapper
# ---------------------------------------------------------------------------
def inner_product_decoder(z, *, dropout_rate=0.0, training=False, tile=None,
                          out_dtype=None, compute_dtype=None, _force_path=None):
    """adj = sigmoid(z @ z.T).  Dropout is identity in eval mode.

    Defaults preserve PyTorch semantics (out/compute dtype == z.dtype).
    For peak TPU throughput pass out_dtype=jnp.bfloat16 (kernel is output-write
    bound) and compute_dtype=jnp.bfloat16 (keeps v5e/v7x on the fast MXU path).
    """
    del dropout_rate, training   # F.dropout(z, p, training=False) == z
    # TODO(synk): training=True stochastic dropout (needs pltpu.prng_* masking).

    n, d = z.shape
    out_dtype = z.dtype if out_dtype is None else out_dtype
    compute_dtype = z.dtype if compute_dtype is None else compute_dtype
    cb = jnp.dtype(compute_dtype).itemsize
    ob = jnp.dtype(out_dtype).itemsize

    budget, limit_cap = _vmem_budget()

    # Output tile: big, lane-dense stores (mem-bound kernel).  With a 2-byte
    # output on a 128 MiB-VMEM part (v5e/v6e), 1024 amortizes per-step overhead.
    if tile is None:
        base = 1024 if (ob <= 2 and budget >= (90 << 20)) else 512
    else:
        base = _round_up(tile, 128)
    tile_n = min(base, _round_up(n, 128))

    n_pad = _round_up(n, tile_n)   # row-pad z so in-kernel slices never go OOB
    d_pad = _round_up(d, 128)      # zero D-padding contributes nothing to z@z.T
    # Largest K tile in {512,256,128} that divides d_pad (no zero-K MXU waste).
    tile_k = next(t for t in (512, 256, 128) if t <= d_pad and d_pad % t == 0)

    if (n_pad, d_pad) != (n, d):
        z_p = jnp.zeros((n_pad, d_pad), compute_dtype).at[:n, :d].set(
            z.astype(compute_dtype))
    else:
        z_p = z.astype(compute_dtype)

    # VMEM footprints of the three execution paths.
    z_res = n_pad * d_pad * cb
    need_resident = (z_res                          # resident z (single-buffered)
                     + 2 * tile_n * d_pad * cb      # double-buffered LHS tile
                     + 2 * tile_n * tile_n * ob     # double-buffered output tile
                     + tile_n * tile_n * 4)         # f32 pre-cast headroom
    need_stream = (4 * tile_n * d_pad * cb          # LHS+RHS tiles, double-buffered
                   + 2 * tile_n * tile_n * ob
                   + tile_n * tile_n * 4)
    need_ktiled = (4 * tile_n * tile_k * cb
                   + 2 * tile_n * tile_n * ob
                   + 2 * tile_n * tile_n * 4)       # + f32 accumulator scratch

    path = _force_path
    if path is None:
        if need_resident <= budget:
            path = "resident"
        elif need_stream <= budget:
            path = "stream"
        else:
            path = "ktiled"

    def _limit(need):
        return int(min(max(need + (8 << 20), 32 << 20), limit_cap))

    if path == "resident":
        # Extra z_res headroom also covers the double-buffered fallback spec.
        vmem_limit = _limit(need_resident + z_res)
        try:
            return _call_resident(z_p, n, n_pad, d_pad, tile_n, out_dtype,
                                  vmem_limit, single_buffer=True)
        except Exception:
            # pipeline_mode=pl.Buffered(1) not supported on this JAX build.
            return _call_resident(z_p, n, n_pad, d_pad, tile_n, out_dtype,
                                  vmem_limit, single_buffer=False)
    if path == "stream":
        return _call_stream(z_p, n, n_pad, d_pad, tile_n, out_dtype,
                            _limit(need_stream))
    return _call_ktiled(z_p, n, n_pad, d_pad, tile_n, tile_k, out_dtype,
                        _limit(need_ktiled))


if __name__ == "__main__":
    key0, key1 = jax.random.split(jax.random.PRNGKey(0))

    def ref_sigmoid_gram(x):
        # HIGHEST precision so the f32 reference is not silently bf16 on TPU.
        return jax.nn.sigmoid(
            jnp.dot(x, x.T, precision=jax.lax.Precision.HIGHEST))

    # 1) Aligned shapes, full-precision defaults (matches PyTorch f32 semantics).
    N, D = 256, 128
    z = jax.random.normal(key0, (N, D), dtype=jnp.float32)
    adj = jax.block_until_ready(
        inner_product_decoder(z, dropout_rate=0.5, training=False))
    ref = ref_sigmoid_gram(z)
    assert adj.shape == (N, N)
    assert jnp.allclose(adj, ref, atol=2e-5, rtol=2e-5), \
        float(jnp.max(jnp.abs(adj - ref)))

    # 2) Non-aligned N/D: exercises row/D zero-padding + masked edge stores
    #    (output is exactly (N, N); no post-kernel slice).
    N2, D2 = 200, 48
    z2 = jax.random.normal(key1, (N2, D2), dtype=jnp.float32)
    adj2 = jax.block_until_ready(inner_product_decoder(z2))
    ref2 = ref_sigmoid_gram(z2)
    assert adj2.shape == (N2, N2)
    assert jnp.allclose(adj2, ref2, atol=2e-5, rtol=2e-5), \
        float(jnp.max(jnp.abs(adj2 - ref2)))

    # 3) Perf configuration: bf16 operands + bf16 output (halves the binding
    #    HBM write traffic; tolerance relaxed for bf16 rounding).
    adj3 = jax.block_until_ready(
        inner_product_decoder(z, out_dtype=jnp.bfloat16,
                              compute_dtype=jnp.bfloat16))
    assert adj3.dtype == jnp.bfloat16
    assert jnp.allclose(adj3.astype(jnp.float32), ref, atol=6e-2), \
        float(jnp.max(jnp.abs(adj3.astype(jnp.float32) - ref)))

    # 4) Exercise the streaming 2-D path and the k-tiled accumulation path.
    adj4 = jax.block_until_ready(inner_product_decoder(z, _force_path="stream"))
    assert jnp.allclose(adj4, ref, atol=2e-5, rtol=2e-5)

    zk = jax.random.normal(jax.random.PRNGKey(2), (256, 640), dtype=jnp.float32)
    adj5 = jax.block_until_ready(inner_product_decoder(zk, _force_path="ktiled"))
    refk = ref_sigmoid_gram(zk)
    assert jnp.allclose(adj5, refk, atol=5e-5, rtol=5e-5), \
        float(jnp.max(jnp.abs(adj5 - refk)))

    print("KERNEL_OK")
</pallas_src>

<mosaic_0001>
module attributes {stable_mosaic.version = 11 : i64} {
  func.func @_ipd_kernel_resident(%arg0: i32, %arg1: i32, %arg2: memref<256x128xf32, #tpu.memory_space<vmem>>, %arg3: memref<256x128xf32, #tpu.memory_space<vmem>>, %arg4: memref<256x256xf32, #tpu.memory_space<vmem>>) attributes {dimension_semantics = [#tpu.dimension_semantics<parallel>, #tpu.dimension_semantics<parallel>], iteration_bounds = array<i64: 1, 1>, scalar_prefetch = 0 : i64, scratch_operands = 0 : i64, tpu.core_type = #tpu.core_type<tc>, window_params = [{transform_indices = @transform_0, window_bounds = array<i64: 256, 128>}, {pipeline_mode = #tpu.pipeline_mode<synchronous>, transform_indices = @transform_1, window_bounds = array<i64: 256, 128>}, {transform_indices = @transform_2, window_bounds = array<i64: 256, 256>}]} {
    %c256_i32 = arith.constant 256 : i32
    %0 = arith.muli %arg1, %c256_i32 : i32
    %1 = tpu.assume_multiple %0, 256 : i32
    %2 = arith.index_cast %1 : i32 to index
    %c0 = arith.constant 0 : index
    %3 = vector.load %arg3[%2, %c0] : memref<256x128xf32, #tpu.memory_space<vmem>>, vector<256x128xf32>
    %c0_0 = arith.constant 0 : index
    %c0_1 = arith.constant 0 : index
    %4 = vector.load %arg2[%c0_0, %c0_1] : memref<256x128xf32, #tpu.memory_space<vmem>>, vector<256x128xf32>
    %cst = arith.constant dense<0.000000e+00> : vector<256x256xf32>
    %5 = tpu.matmul %4, %3, %cst {dimension_numbers = #tpu.dot_dimension_numbers<[1], [1], [0], [0], [0, 0, 1, 0], [], []>} : vector<256x128xf32>, vector<256x128xf32>, vector<256x256xf32> -> vector<256x256xf32>
    %cst_2 = arith.constant 5.000000e-01 : f32
    %6 = vector.broadcast %cst_2 : f32 to vector<256x256xf32>
    %7 = arith.mulf %6, %5 : vector<256x256xf32>
    %8 = math.tanh %7 : vector<256x256xf32>
    %cst_3 = arith.constant 5.000000e-01 : f32
    %9 = vector.broadcast %cst_3 : f32 to vector<256x256xf32>
    %10 = arith.mulf %9, %8 : vector<256x256xf32>
    %cst_4 = arith.constant 5.000000e-01 : f32
    %11 = vector.broadcast %cst_4 : f32 to vector<256x256xf32>
    %12 = arith.addf %10, %11 : vector<256x256xf32>
    %c0_5 = arith.constant 0 : index
    %c0_6 = arith.constant 0 : index
    %13 = vector.load %arg4[%c0_5, %c0_6] : memref<256x256xf32, #tpu.memory_space<vmem>>, vector<256x256xf32>
    tpu.vector_store %arg4[%c0_5, %c0_6], %12 {strides = array<i32>} : memref<256x256xf32, #tpu.memory_space<vmem>>, vector<256x256xf32>,
    return
  }
  func.func @transform_0(%arg0: i32, %arg1: i32) -> (i32, i32) {
    %c0_i32 = arith.constant 0 : i32
    %c0_i32_0 = arith.constant 0 : i32
    return %arg0, %c0_i32 : i32, i32
  }
  func.func @transform_1(%arg0: i32, %arg1: i32) -> (i32, i32) {
    %c0_i32 = arith.constant 0 : i32
    %c0_i32_0 = arith.constant 0 : i32
    %c0_i32_1 = arith.constant 0 : i32
    return %c0_i32, %c0_i32_0 : i32, i32
  }
  func.func @transform_2(%arg0: i32, %arg1: i32) -> (i32, i32) {
    %c0_i32 = arith.constant 0 : i32
    return %arg0, %arg1 : i32, i32
  }
}

module attributes {stable_mosaic.version = 11 : i64} {
  func.func @_ipd_kernel_resident(%arg0: i32, %arg1: i32, %arg2: memref<256x128xf32, #tpu.memory_space<vmem>>, %arg3: memref<256x128xf32, #tpu.memory_space<vmem>>, %arg4: memref<256x256xf32, #tpu.memory_space<vmem>>) attributes {dimension_semantics = [#tpu.dimension_semantics<parallel>, #tpu.dimension_semantics<parallel>], iteration_bounds = array<i64: 1, 1>, scalar_prefetch = 0 : i64, scratch_operands = 0 : i64, tpu.core_type = #tpu.core_type<tc>, window_params = [{transform_indices = @transform_0, window_bounds = array<i64: 256, 128>}, {pipeline_mode = #tpu.pipeline_mode<synchronous>, transform_indices = @transform_1, window_bounds = array<i64: 256, 128>}, {transform_indices = @transform_2, window_bounds = array<i64: 256, 256>}]} {
    %c256_i32 = arith.constant 256 : i32
    %0 = arith.muli %arg1, %c256_i32 : i32
    %1 = tpu.assume_multiple %0, 256 : i32
    %2 = arith.index_cast %1 : i32 to index
    %c0 = arith.constant 0 : index
    %3 = vector.load %arg3[%2, %c0] : memref<256x128xf32, #tpu.memory_space<vmem>>, vector<256x128xf32>
    %c0_0 = arith.constant 0 : index
    %c0_1 = arith.constant 0 : index
    %4 = vector.load %arg2[%c0_0, %c0_1] : memref<256x128xf32, #tpu.memory_space<vmem>>, vector<256x128xf32>
    %cst = arith.constant dense<0.000000e+00> : vector<256x256xf32>
    %5 = tpu.matmul %4, %3, %cst {dimension_numbers = #tpu.dot_dimension_numbers<[1], [1], [0], [0], [0, 0, 1, 0], [], []>} : vector<256x128xf32>, vector<256x128xf32>, vector<256x256xf32> -> vector<256x256xf32>
    %cst_2 = arith.constant 5.000000e-01 : f32
    %6 = vector.broadcast %cst_2 : f32 to vector<256x256xf32>
    %7 = arith.mulf %6, %5 : vector<256x256xf32>
    %8 = math.tanh %7 : vector<256x256xf32>
    %cst_3 = arith.constant 5.000000e-01 : f32
    %9 = vector.broadcast %cst_3 : f32 to vector<256x256xf32>
    %10 = arith.mulf %9, %8 : vector<256x256xf32>
    %cst_4 = arith.constant 5.000000e-01 : f32
    %11 = vector.broadcast %cst_4 : f32 to vector<256x256xf32>
    %12 = arith.addf %10, %11 : vector<256x256xf32>
    %c0_5 = arith.constant 0 : index
    %c0_6 = arith.constant 0 : index
    %13 = vector.load %arg4[%c0_5, %c0_6] : memref<256x256xf32, #tpu.memory_space<vmem>>, vector<256x256xf32>
    tpu.vector_store %arg4[%c0_5, %c0_6], %12 {strides = array<i32>} : memref<256x256xf32, #tpu.memory_space<vmem>>, vector<256x256xf32>,
    return
  }
  func.func @transform_0(%arg0: i32, %arg1: i32) -> (i32, i32) {
    %c0_i32 = arith.constant 0 : i32
    %c0_i32_0 = arith.constant 0 : i32
    return %arg0, %c0_i32 : i32, i32
  }
  func.func @transform_1(%arg0: i32, %arg1: i32) -> (i32, i32) {
    %c0_i32 = arith.constant 0 : i32
    %c0_i32_0 = arith.constant 0 : i32
    %c0_i32_1 = arith.constant 0 : i32
    return %c0_i32, %c0_i32_0 : i32, i32
  }
  func.func @transform_2(%arg0: i32, %arg1: i32) -> (i32, i32) {
    %c0_i32 = arith.constant 0 : i32
    return %arg0, %arg1 : i32, i32
  }
}

</mosaic_0001>

<llo_original>
// kernel: tpu_custom_call.1
$region0: #{tpu_custom_call.1}
  #allocation0 [shape = 'u32[]', space=smem, size = 0x4, offset = 0x4, fixed_abs, tag = 'smem constant byte address 0x4 - core index']
  #allocation1 [shape = 'u32[144,128]{1,0:T(1,128)}', space=vmem, size = 0x12000, scoped, tag = 'internal scratch']
  %s0 = inlined_call_operand.hbm [shape: f32[256,128], index: 0, kind: input, shape index: {}]
  %s1 = inlined_call_operand.hbm [shape: f32[256,128], index: 1, kind: input, shape index: {}]
  %s2 = inlined_call_operand.hbm [shape: f32[256,256], index: 2, kind: output, shape index: {}]
  %s3 = sld [smem:[#allocation0]]
  $region26: #{tpu_custom_call.1} parent=0
    _
  %s5 = ssub.s32 1, %s3
  %s6 = scalar_select 0, %s5, %s3
  $region1: #{tpu_custom_call.1} parent=0
    #allocation2 [shape = 'u8[131072]{0}', space=vmem, size = 0x20000, scoped, tag = 'input window, operand 0, single buffered']
    #allocation3 [shape = 's32[1]{0}', space=sflag, size = 0x4, scoped, tag = 'scoped memory for tpu_custom_call.1']
    #allocation4 [shape = 's32[1]{0}', space=sflag, size = 0x4, scoped, tag = 'scoped memory for tpu_custom_call.1']
    #allocation5 [shape = 'u8[131072]{0}', space=vmem, size = 0x20000, scoped, tag = 'input window, operand 1, single buffered']
    #allocation6 [shape = 's32[1]{0}', space=sflag, size = 0x4, scoped, tag = 'scoped memory for tpu_custom_call.1']
    #allocation7 [shape = 'u8[262144]{0}', space=vmem, size = 0x40000, scoped, tag = 'output window, operand 0, single buffered']
    %7 = vsyncpa [#allocation3], 0
    %8 = vsyncpa [#allocation6], 0
    %9 = vsyncpa [#allocation4], 0
    // Predicated region
    $region2: #{tpu_custom_call.1} parent=1 // pred_check
      _
    $region3: #{tpu_custom_call.1} parent=1 // pred_check_branch
      %11 = sbr.rel (0) target = $region5
    $region4: #{tpu_custom_call.1} parent=1 // pred_region
      %s13 = ssub.s32 4096, 4096
      %14 = vsyncadd [#allocation3], %s13
      %s15 = sshll.u32 [#allocation2], 4
      %s16 = int_to_ptr.vmem [resolvable:$true] %s15
      %21 = dma.hbm_to_vmem [thread:$0]  %s0, 4096, %s16, [#allocation3], 128, 128, 8
    $region5: #{tpu_custom_call.1} parent=1 // pred_fallthru
      _
    // Predicated region
    $region6: #{tpu_custom_call.1} parent=1 // pred_check
      _
    $region7: #{tpu_custom_call.1} parent=1 // pred_check_branch
      %23 = sbr.rel (0) target = $region9
    $region8: #{tpu_custom_call.1} parent=1 // pred_region
      %s25 = ssub.s32 4096, 4096
      %26 = vsyncadd [#allocation6], %s25
      %s27 = sshll.u32 [#allocation5], 4
      %s28 = int_to_ptr.vmem [resolvable:$true] %s27
      %33 = dma.hbm_to_vmem [thread:$0]  %s1, 4096, %s28, [#allocation6], 128, 128, 8
    $region9: #{tpu_custom_call.1} parent=1 // pred_fallthru
      _
    // Predicated region
    $region10: #{tpu_custom_call.1} parent=1 // pred_check
      _
    $region11: #{tpu_custom_call.1} parent=1 // pred_check_branch
      %35 = sbr.rel (0) target = $region13
    $region12: #{tpu_custom_call.1} parent=1 // pred_region
      %36 = dma.done [#allocation3], 4096
    $region13: #{tpu_custom_call.1} parent=1 // pred_fallthru
      _
    // Predicated region
    $region14: #{tpu_custom_call.1} parent=1 // pred_check
      _
    $region15: #{tpu_custom_call.1} parent=1 // pred_check_branch
      %38 = sbr.rel (0) target = $region17
    $region16: #{tpu_custom_call.1} parent=1 // pred_region
      %39 = dma.done [#allocation6], 4096
    $region17: #{tpu_custom_call.1} parent=1 // pred_fallthru
      _
    %s40 = smul.u32 0, 256
    %s41 = scalar_lea.vmem [#allocation5], %s40
    %v42 = vld [vmem:[%s41] sm:$0xff]
    %v43 = vld [vmem:[%s41 + $0x8] sm:$0xff]
    %v44 = vld [vmem:[%s41 + $0x10] sm:$0xff]
    %v45 = vld [vmem:[%s41 + $0x18] sm:$0xff]
    %v46 = vld [vmem:[%s41 + $0x20] sm:$0xff]
    %v47 = vld [vmem:[%s41 + $0x28] sm:$0xff]
    %v48 = vld [vmem:[%s41 + $0x30] sm:$0xff]
    %v49 = vld [vmem:[%s41 + $0x38] sm:$0xff]
    %v50 = vld [vmem:[%s41 + $0x40] sm:$0xff]
    %v51 = vld [vmem:[%s41 + $0x48] sm:$0xff]
    %v52 = vld [vmem:[%s41 + $0x50] sm:$0xff]
    %v53 = vld [vmem:[%s41 + $0x58] sm:$0xff]
    %v54 = vld [vmem:[%s41 + $0x60] sm:$0xff]
    %v55 = vld [vmem:[%s41 + $0x68] sm:$0xff]
    %v56 = vld [vmem:[%s41 + $0x70] sm:$0xff]
    %v57 = vld [vmem:[%s41 + $0x78] sm:$0xff]
    %v58 = vld [vmem:[%s41 + $0x80] sm:$0xff]
    %v59 = vld [vmem:[%s41 + $0x88] sm:$0xff]
    %v60 = vld [vmem:[%s41 + $0x90] sm:$0xff]
    %v61 = vld [vmem:[%s41 + $0x98] sm:$0xff]
    %v62 = vld [vmem:[%s41 + $0xa0] sm:$0xff]
    %v63 = vld [vmem:[%s41 + $0xa8] sm:$0xff]
    %v64 = vld [vmem:[%s41 + $0xb0] sm:$0xff]
    %v65 = vld [vmem:[%s41 + $0xb8] sm:$0xff]
    %v66 = vld [vmem:[%s41 + $0xc0] sm:$0xff]
    %v67 = vld [vmem:[%s41 + $0xc8] sm:$0xff]
    %v68 = vld [vmem:[%s41 + $0xd0] sm:$0xff]
    %v69 = vld [vmem:[%s41 + $0xd8] sm:$0xff]
    %v70 = vld [vmem:[%s41 + $0xe0] sm:$0xff]
    %v71 = vld [vmem:[%s41 + $0xe8] sm:$0xff]
    %v72 = vld [vmem:[%s41 + $0xf0] sm:$0xff]
    %v73 = vld [vmem:[%s41 + $0xf8] sm:$0xff]
    %v74 = vld [vmem:[#allocation2] sm:$0xff]
    %v75 = vld [vmem:[#allocation2 + $0x8] sm:$0xff]
    %v76 = vld [vmem:[#allocation2 + $0x10] sm:$0xff]
    %v77 = vld [vmem:[#allocation2 + $0x18] sm:$0xff]
    %v78 = vld [vmem:[#allocation2 + $0x20] sm:$0xff]
    %v79 = vld [vmem:[#allocation2 + $0x28] sm:$0xff]
    %v80 = vld [vmem:[#allocation2 + $0x30] sm:$0xff]
    %v81 = vld [vmem:[#allocation2 + $0x38] sm:$0xff]
    %v82 = vld [vmem:[#allocation2 + $0x40] sm:$0xff]
    %v83 = vld [vmem:[#allocation2 + $0x48] sm:$0xff]
    %v84 = vld [vmem:[#allocation2 + $0x50] sm:$0xff]
    %v85 = vld [vmem:[#allocation2 + $0x58] sm:$0xff]
    %v86 = vld [vmem:[#allocation2 + $0x60] sm:$0xff]
    %v87 = vld [vmem:[#allocation2 + $0x68] sm:$0xff]
    %v88 = vld [vmem:[#allocation2 + $0x70] sm:$0xff]
    %v89 = vld [vmem:[#allocation2 + $0x78] sm:$0xff]
    %v90 = vld [vmem:[#allocation2 + $0x80] sm:$0xff]
    %v91 = vld [vmem:[#allocation2 + $0x88] sm:$0xff]
    %v92 = vld [vmem:[#allocation2 + $0x90] sm:$0xff]
    %v93 = vld [vmem:[#allocation2 + $0x98] sm:$0xff]
    %v94 = vld [vmem:[#allocation2 + $0xa0] sm:$0xff]
    %v95 = vld [vmem:[#allocation2 + $0xa8] sm:$0xff]
    %v96 = vld [vmem:[#allocation2 + $0xb0] sm:$0xff]
    %v97 = vld [vmem:[#allocation2 + $0xb8] sm:$0xff]
    %v98 = vld [vmem:[#allocation2 + $0xc0] sm:$0xff]
    %v99 = vld [vmem:[#allocation2 + $0xc8] sm:$0xff]
    %v100 = vld [vmem:[#allocation2 + $0xd0] sm:$0xff]
    %v101 = vld [vmem:[#allocation2 + $0xd8] sm:$0xff]
    %v102 = vld [vmem:[#allocation2 + $0xe0] sm:$0xff]
    %v103 = vld [vmem:[#allocation2 + $0xe8] sm:$0xff]
    %v104 = vld [vmem:[#allocation2 + $0xf0] sm:$0xff]
    %v105 = vld [vmem:[#allocation2 + $0xf8] sm:$0xff]
    %106 = vmatprep.subr.mxu0 0.0
    %107 = vmatpush1.xpose.msra.mxu0 %v42
    %108 = vmatprep.subr.mxu0 0.0
    %109 = vmatpush1.xpose.msra.mxu0 %v43
    %110 = vmatprep.subr.mxu0 0.0
    %111 = vmatpush1.xpose.msra.mxu0 %v44
    %112 = vmatprep.subr.mxu0 0.0
    %113 = vmatpush1.xpose.msra.mxu0 %v45
    %114 = vmatprep.subr.mxu0 0.0
    %115 = vmatpush1.xpose.msra.mxu0 %v46
    %116 = vmatprep.subr.mxu0 0.0
    %117 = vmatpush1.xpose.msra.mxu0 %v47
    %118 = vmatprep.subr.mxu0 0.0
    %119 = vmatpush1.xpose.msra.mxu0 %v48
    %120 = vmatprep.subr.mxu0 0.0
    %121 = vmatpush1.xpose.msra.mxu0 %v49
    %122 = vmatprep.subr.mxu0 0.0
    %123 = vmatpush1.xpose.msra.mxu0 %v50
    %124 = vmatprep.subr.mxu0 0.0
    %125 = vmatpush1.xpose.msra.mxu0 %v51
    %126 = vmatprep.subr.mxu0 0.0
    %127 = vmatpush1.xpose.msra.mxu0 %v52
    %128 = vmatprep.subr.mxu0 0.0
    %129 = vmatpush1.xpose.msra.mxu0 %v53
    %130 = vmatprep.subr.mxu0 0.0
    %131 = vmatpush1.xpose.msra.mxu0 %v54
    %132 = vmatprep.subr.mxu0 0.0
    %133 = vmatpush1.xpose.msra.mxu0 %v55
    %134 = vmatprep.subr.mxu0 0.0
    %135 = vmatpush1.xpose.msra.mxu0 %v56
    %136 = vmatprep.subr.mxu0 0.0
    %137 = vmatpush1.xpose.msra.mxu0 %v57
    %138 = vmatprep.subr.mxu0 0.0
    %139 = vmatpush1.xpose.msra.mxu0 %v58
    %140 = vmatprep.subr.mxu0 0.0
    %141 = vmatpush1.xpose.msra.mxu0 %v59
    %142 = vmatprep.subr.mxu0 0.0
    %143 = vmatpush1.xpose.msra.mxu0 %v60
    %144 = vmatprep.subr.mxu0 0.0
    %145 = vmatpush1.xpose.msra.mxu0 %v61
    %146 = vmatprep.subr.mxu0 0.0
    %147 = vmatpush1.xpose.msra.mxu0 %v62
    %148 = vmatprep.subr.mxu0 0.0
    %149 = vmatpush1.xpose.msra.mxu0 %v63
    %150 = vmatprep.subr.mxu0 0.0
    %151 = vmatpush1.xpose.msra.mxu0 %v64
    %152 = vmatprep.subr.mxu0 0.0
    %153 = vmatpush1.xpose.msra.mxu0 %v65
    %154 = vmatprep.subr.mxu0 0.0
    %155 = vmatpush1.xpose.msra.mxu0 %v66
    %156 = vmatprep.subr.mxu0 0.0
    %157 = vmatpush1.xpose.msra.mxu0 %v67
    %158 = vmatprep.subr.mxu0 0.0
    %159 = vmatpush1.xpose.msra.mxu0 %v68
    %160 = vmatprep.subr.mxu0 0.0
    %161 = vmatpush1.xpose.msra.mxu0 %v69
    %162 = vmatprep.subr.mxu0 0.0
    %163 = vmatpush1.xpose.msra.mxu0 %v70
    %164 = vmatprep.subr.mxu0 0.0
    %165 = vmatpush1.xpose.msra.mxu0 %v71
    %166 = vmatprep.subr.mxu0 0.0
    %167 = vmatpush1.xpose.msra.mxu0 %v72
    %168 = vmatprep.subr.mxu0 0.0
    %169 = vmatpush1.xpose.msra.mxu0 %v73
    %170 = vmatprep.mubr.f32.mxu0 0.0
    %171 = vmatmul.mubr.f32.gmra.mrb[0].mxu0 %v74
    %v172 = vpop.f32.mrb[0].mxu0
    %v173 = vadd.f32 0.0, %v172
    %v174 = vpop.f32.mrb[0].mxu0
    %v175 = vadd.f32 0.0, %v174
    %176 = vmatprep.mubr.f32.mxu0 0.0
    %177 = vmatmul.mubr.f32.gmra.mrb[0].mxu0 %v75
    %v178 = vpop.f32.mrb[0].mxu0
    %v179 = vadd.f32 0.0, %v178
    %v180 = vpop.f32.mrb[0].mxu0
    %v181 = vadd.f32 0.0, %v180
    %182 = vmatprep.mubr.f32.mxu0 0.0
    %183 = vmatmul.mubr.f32.gmra.mrb[0].mxu0 %v76
    %v184 = vpop.f32.mrb[0].mxu0
    %v185 = vadd.f32 0.0, %v184
    %v186 = vpop.f32.mrb[0].mxu0
    %v187 = vadd.f32 0.0, %v186
    %188 = vmatprep.mubr.f32.mxu0 0.0
    %189 = vmatmul.mubr.f32.gmra.mrb[0].mxu0 %v77
    %v190 = vpop.f32.mrb[0].mxu0
    %v191 = vadd.f32 0.0, %v190
    %v192 = vpop.f32.mrb[0].mxu0
    %v193 = vadd.f32 0.0, %v192
    %194 = vmatprep.mubr.f32.mxu0 0.0
    %195 = vmatmul.mubr.f32.gmra.mrb[0].mxu0 %v78
    %v196 = vpop.f32.mrb[0].mxu0
    %v197 = vadd.f32 0.0, %v196
    %v198 = vpop.f32.mrb[0].mxu0
    %v199 = vadd.f32 0.0, %v198
    %200 = vmatprep.mubr.f32.mxu0 0.0
    %201 = vmatmul.mubr.f32.gmra.mrb[0].mxu0 %v79
    %v202 = vpop.f32.mrb[0].mxu0
    %v203 = vadd.f32 0.0, %v202
    %v204 = vpop.f32.mrb[0].mxu0
    %v205 = vadd.f32 0.0, %v204
    %206 = vmatprep.mubr.f32.mxu0 0.0
    %207 = vmatmul.mubr.f32.gmra.mrb[0].mxu0 %v80
    %v208 = vpop.f32.mrb[0].mxu0
    %v209 = vadd.f32 0.0, %v208
    %v210 = vpop.f32.mrb[0].mxu0
    %v211 = vadd.f32 0.0, %v210
    %212 = vmatprep.mubr.f32.mxu0 0.0
    %213 = vmatmul.mubr.f32.gmra.mrb[0].mxu0 %v81
    %v214 = vpop.f32.mrb[0].mxu0
    %v215 = vadd.f32 0.0, %v214
    %v216 = vpop.f32.mrb[0].mxu0
    %v217 = vadd.f32 0.0, %v216
    %218 = vmatprep.mubr.f32.mxu0 0.0
    %219 = vmatmul.mubr.f32.gmra.mrb[0].mxu0 %v82
    %v220 = vpop.f32.mrb[0].mxu0
    %v221 = vadd.f32 0.0, %v220
    %v222 = vpop.f32.mrb[0].mxu0
    %v223 = vadd.f32 0.0, %v222
    %224 = vmatprep.mubr.f32.mxu0 0.0
    %225 = vmatmul.mubr.f32.gmra.mrb[0].mxu0 %v83
    %v226 = vpop.f32.mrb[0].mxu0
    %v227 = vadd.f32 0.0, %v226
    %v228 = vpop.f32.mrb[0].mxu0
    %v229 = vadd.f32 0.0, %v228
    %230 = vmatprep.mubr.f32.mxu0 0.0
    %231 = vmatmul.mubr.f32.gmra.mrb[0].mxu0 %v84
    %v232 = vpop.f32.mrb[0].mxu0
    %v233 = vadd.f32 0.0, %v232
    %v234 = vpop.f32.mrb[0].mxu0
    %v235 = vadd.f32 0.0, %v234
    %236 = vmatprep.mubr.f32.mxu0 0.0
    %237 = vmatmul.mubr.f32.gmra.mrb[0].mxu0 %v85
    %v238 = vpop.f32.mrb[0].mxu0
    %v239 = vadd.f32 0.0, %v238
    %v240 = vpop.f32.mrb[0].mxu0
    %v241 = vadd.f32 0.0, %v240
    %242 = vmatprep.mubr.f32.mxu0 0.0
    %243 = vmatmul.mubr.f32.gmra.mrb[0].mxu0 %v86
    %v244 = vpop.f32.mrb[0].mxu0
    %v245 = vadd.f32 0.0, %v244
    %v246 = vpop.f32.mrb[0].mxu0
    %v247 = vadd.f32 0.0, %v246
    %248 = vmatprep.mubr.f32.mxu0 0.0
    %249 = vmatmul.mubr.f32.gmra.mrb[0].mxu0 %v87
    %v250 = vpop.f32.mrb[0].mxu0
    %v251 = vadd.f32 0.0, %v250
    %v252 = vpop.f32.mrb[0].mxu0
    %v253 = vadd.f32 0.0, %v252
    %254 = vmatprep.mubr.f32.mxu0 0.0
    %255 = vmatmul.mubr.f32.gmra.mrb[0].mxu0 %v88
    %v256 = vpop.f32.mrb[0].mxu0
    %v257 = vadd.f32 0.0, %v256
    %v258 = vpop.f32.mrb[0].mxu0
    %v259 = vadd.f32 0.0, %v258
    %260 = vmatprep.mubr.f32.mxu0 0.0
    %261 = vmatmul.mubr.f32.gmra.mrb[0].mxu0 %v89
    %v262 = vpop.f32.mrb[0].mxu0
    %v263 = vadd.f32 0.0, %v262
    %v264 = vpop.f32.mrb[0].mxu0
    %v265 = vadd.f32 0.0, %v264
    %266 = vmatprep.mubr.f32.mxu0 0.0
    %267 = vmatmul.mubr.f32.gmra.mrb[0].mxu0 %v90
    %v268 = vpop.f32.mrb[0].mxu0
    %v269 = vadd.f32 0.0, %v268
    %v270 = vpop.f32.mrb[0].mxu0
    %v271 = vadd.f32 0.0, %v270
    %272 = vmatprep.mubr.f32.mxu0 0.0
    %273 = vmatmul.mubr.f32.gmra.mrb[0].mxu0 %v91
    %v274 = vpop.f32.mrb[0].mxu0
    %v275 = vadd.f32 0.0, %v274
    %v276 = vpop.f32.mrb[0].mxu0
    %v277 = vadd.f32 0.0, %v276
    %278 = vmatprep.mubr.f32.mxu0 0.0
    %279 = vmatmul.mubr.f32.gmra.mrb[0].mxu0 %v92
    %v280 = vpop.f32.mrb[0].mxu0
    %v281 = vadd.f32 0.0, %v280
    %v282 = vpop.f32.mrb[0].mxu0
    %v283 = vadd.f32 0.0, %v282
    %284 = vmatprep.mubr.f32.mxu0 0.0
    %285 = vmatmul.mubr.f32.gmra.mrb[0].mxu0 %v93
    %v286 = vpop.f32.mrb[0].mxu0
    %v287 = vadd.f32 0.0, %v286
    %v288 = vpop.f32.mrb[0].mxu0
    %v289 = vadd.f32 0.0, %v288
    %290 = vmatprep.mubr.f32.mxu0 0.0
    %291 = vmatmul.mubr.f32.gmra.mrb[0].mxu0 %v94
    %v292 = vpop.f32.mrb[0].mxu0
    %v293 = vadd.f32 0.0, %v292
    %v294 = vpop.f32.mrb[0].mxu0
    %v295 = vadd.f32 0.0, %v294
    %296 = vmatprep.mubr.f32.mxu0 0.0
    %297 = vmatmul.mubr.f32.gmra.mrb[0].mxu0 %v95
    %v298 = vpop.f32.mrb[0].mxu0
    %v299 = vadd.f32 0.0, %v298
    %v300 = vpop.f32.mrb[0].mxu0
    %v301 = vadd.f32 0.0, %v300
    %302 = vmatprep.mubr.f32.mxu0 0.0
    %303 = vmatmul.mubr.f32.gmra.mrb[0].mxu0 %v96
    %v304 = vpop.f32.mrb[0].mxu0
    %v305 = vadd.f32 0.0, %v304
    %v306 = vpop.f32.mrb[0].mxu0
    %v307 = vadd.f32 0.0, %v306
    %308 = vmatprep.mubr.f32.mxu0 0.0
    %309 = vmatmul.mubr.f32.gmra.mrb[0].mxu0 %v97
    %v310 = vpop.f32.mrb[0].mxu0
    %v311 = vadd.f32 0.0, %v310
    %v312 = vpop.f32.mrb[0].mxu0
    %v313 = vadd.f32 0.0, %v312
    %314 = vmatprep.mubr.f32.mxu0 0.0
    %315 = vmatmul.mubr.f32.gmra.mrb[0].mxu0 %v98
    %v316 = vpop.f32.mrb[0].mxu0
    %v317 = vadd.f32 0.0, %v316
    %v318 = vpop.f32.mrb[0].mxu0
    %v319 = vadd.f32 0.0, %v318
    %320 = vmatprep.mubr.f32.mxu0 0.0
    %321 = vmatmul.mubr.f32.gmra.mrb[0].mxu0 %v99
    %v322 = vpop.f32.mrb[0].mxu0
    %v323 = vadd.f32 0.0, %v322
    %v324 = vpop.f32.mrb[0].mxu0
    %v325 = vadd.f32 0.0, %v324
    %326 = vmatprep.mubr.f32.mxu0 0.0
    %327 = vmatmul.mubr.f32.gmra.mrb[0].mxu0 %v100
    %v328 = vpop.f32.mrb[0].mxu0
    %v329 = vadd.f32 0.0, %v328
    %v330 = vpop.f32.mrb[0].mxu0
    %v331 = vadd.f32 0.0, %v330
    %332 = vmatprep.mubr.f32.mxu0 0.0
    %333 = vmatmul.mubr.f32.gmra.mrb[0].mxu0 %v101
    %v334 = vpop.f32.mrb[0].mxu0
    %v335 = vadd.f32 0.0, %v334
    %v336 = vpop.f32.mrb[0].mxu0
    %v337 = vadd.f32 0.0, %v336
    %338 = vmatprep.mubr.f32.mxu0 0.0
    %339 = vmatmul.mubr.f32.gmra.mrb[0].mxu0 %v102
    %v340 = vpop.f32.mrb[0].mxu0
    %v341 = vadd.f32 0.0, %v340
    %v342 = vpop.f32.mrb[0].mxu0
    %v343 = vadd.f32 0.0, %v342
    %344 = vmatprep.mubr.f32.mxu0 0.0
    %345 = vmatmul.mubr.f32.gmra.mrb[0].mxu0 %v103
    %v346 = vpop.f32.mrb[0].mxu0
    %v347 = vadd.f32 0.0, %v346
    %v348 = vpop.f32.mrb[0].mxu0
    %v349 = vadd.f32 0.0, %v348
    %350 = vmatprep.mubr.f32.mxu0 0.0
    %351 = vmatmul.mubr.f32.gmra.mrb[0].mxu0 %v104
    %v352 = vpop.f32.mrb[0].mxu0
    %v353 = vadd.f32 0.0, %v352
    %v354 = vpop.f32.mrb[0].mxu0
    %v355 = vadd.f32 0.0, %v354
    %356 = vmatprep.mubr.f32.mxu0 0.0
    %357 = vmatmul.mubr.f32.gmra.mrb[0].mxu0 %v105
    %v358 = vpop.f32.mrb[0].mxu0
    %v359 = vadd.f32 0.0, %v358
    %v360 = vpop.f32.mrb[0].mxu0
    %v361 = vadd.f32 0.0, %v360
    %362 = vdwg.mxu0
    %v363 = vmul.f32 %v173, 0.5
    %v364 = vmul.f32 %v175, 0.5
    %v365 = vmul.f32 %v179, 0.5
    %v366 = vmul.f32 %v181, 0.5
    %v367 = vmul.f32 %v185, 0.5
    %v368 = vmul.f32 %v187, 0.5
    %v369 = vmul.f32 %v191, 0.5
    %v370 = vmul.f32 %v193, 0.5
    %v371 = vmul.f32 %v197, 0.5
    %v372 = vmul.f32 %v199, 0.5
    %v373 = vmul.f32 %v203, 0.5
    %v374 = vmul.f32 %v205, 0.5
    %v375 = vmul.f32 %v209, 0.5
    %v376 = vmul.f32 %v211, 0.5
    %v377 = vmul.f32 %v215, 0.5
    %v378 = vmul.f32 %v217, 0.5
    %v379 = vmul.f32 %v221, 0.5
    %v380 = vmul.f32 %v223, 0.5
    %v381 = vmul.f32 %v227, 0.5
    %v382 = vmul.f32 %v229, 0.5
    %v383 = vmul.f32 %v233, 0.5
    %v384 = vmul.f32 %v235, 0.5
    %v385 = vmul.f32 %v239, 0.5
    %v386 = vmul.f32 %v241, 0.5
    %v387 = vmul.f32 %v245, 0.5
    %v388 = vmul.f32 %v247, 0.5
    %v389 = vmul.f32 %v251, 0.5
    %v390 = vmul.f32 %v253, 0.5
    %v391 = vmul.f32 %v257, 0.5
    %v392 = vmul.f32 %v259, 0.5
    %v393 = vmul.f32 %v263, 0.5
    %v394 = vmul.f32 %v265, 0.5
    %v395 = vmul.f32 %v269, 0.5
    %v396 = vmul.f32 %v271, 0.5
    %v397 = vmul.f32 %v275, 0.5
    %v398 = vmul.f32 %v277, 0.5
    %v399 = vmul.f32 %v281, 0.5
    %v400 = vmul.f32 %v283, 0.5
    %v401 = vmul.f32 %v287, 0.5
    %v402 = vmul.f32 %v289, 0.5
    %v403 = vmul.f32 %v293, 0.5
    %v404 = vmul.f32 %v295, 0.5
    %v405 = vmul.f32 %v299, 0.5
    %v406 = vmul.f32 %v301, 0.5
    %v407 = vmul.f32 %v305, 0.5
    %v408 = vmul.f32 %v307, 0.5
    %v409 = vmul.f32 %v311, 0.5
    %v410 = vmul.f32 %v313, 0.5
    %v411 = vmul.f32 %v317, 0.5
    %v412 = vmul.f32 %v319, 0.5
    %v413 = vmul.f32 %v323, 0.5
    %v414 = vmul.f32 %v325, 0.5
    %v415 = vmul.f32 %v329, 0.5
    %v416 = vmul.f32 %v331, 0.5
    %v417 = vmul.f32 %v335, 0.5
    %v418 = vmul.f32 %v337, 0.5
    %v419 = vmul.f32 %v341, 0.5
    %v420 = vmul.f32 %v343, 0.5
    %v421 = vmul.f32 %v347, 0.5
    %v422 = vmul.f32 %v349, 0.5
    %v423 = vmul.f32 %v353, 0.5
    %v424 = vmul.f32 %v355, 0.5
    %v425 = vmul.f32 %v359, 0.5
    %v426 = vmul.f32 %v361, 0.5
    %v427 = vtanh.pop %v363
    %v428 = vtanh.pop %v364
    %v429 = vtanh.pop %v365
    %v430 = vtanh.pop %v366
    %v431 = vtanh.pop %v367
    %v432 = vtanh.pop %v368
    %v433 = vtanh.pop %v369
    %v434 = vtanh.pop %v370
    %v435 = vtanh.pop %v371
    %v436 = vtanh.pop %v372
    %v437 = vtanh.pop %v373
    %v438 = vtanh.pop %v374
    %v439 = vtanh.pop %v375
    %v440 = vtanh.pop %v376
    %v441 = vtanh.pop %v377
    %v442 = vtanh.pop %v378
    %v443 = vtanh.pop %v379
    %v444 = vtanh.pop %v380
    %v445 = vtanh.pop %v381
    %v446 = vtanh.pop %v382
    %v447 = vtanh.pop %v383
    %v448 = vtanh.pop %v384
    %v449 = vtanh.pop %v385
    %v450 = vtanh.pop %v386
    %v451 = vtanh.pop %v387
    %v452 = vtanh.pop %v388
    %v453 = vtanh.pop %v389
    %v454 = vtanh.pop %v390
    %v455 = vtanh.pop %v391
    %v456 = vtanh.pop %v392
    %v457 = vtanh.pop %v393
    %v458 = vtanh.pop %v394
    %v459 = vtanh.pop %v395
    %v460 = vtanh.pop %v396
    %v461 = vtanh.pop %v397
    %v462 = vtanh.pop %v398
    %v463 = vtanh.pop %v399
    %v464 = vtanh.pop %v400
    %v465 = vtanh.pop %v401
    %v466 = vtanh.pop %v402
    %v467 = vtanh.pop %v403
    %v468 = vtanh.pop %v404
    %v469 = vtanh.pop %v405
    %v470 = vtanh.pop %v406
    %v471 = vtanh.pop %v407
    %v472 = vtanh.pop %v408
    %v473 = vtanh.pop %v409
    %v474 = vtanh.pop %v410
    %v475 = vtanh.pop %v411
    %v476 = vtanh.pop %v412
    %v477 = vtanh.pop %v413
    %v478 = vtanh.pop %v414
    %v479 = vtanh.pop %v415
    %v480 = vtanh.pop %v416
    %v481 = vtanh.pop %v417
    %v482 = vtanh.pop %v418
    %v483 = vtanh.pop %v419
    %v484 = vtanh.pop %v420
    %v485 = vtanh.pop %v421
    %v486 = vtanh.pop %v422
    %v487 = vtanh.pop %v423
    %v488 = vtanh.pop %v424
    %v489 = vtanh.pop %v425
    %v490 = vtanh.pop %v426
    %v491 = vmul.f32 %v427, 0.5
    %v492 = vmul.f32 %v428, 0.5
    %v493 = vmul.f32 %v429, 0.5
    %v494 = vmul.f32 %v430, 0.5
    %v495 = vmul.f32 %v431, 0.5
    %v496 = vmul.f32 %v432, 0.5
    %v497 = vmul.f32 %v433, 0.5
    %v498 = vmul.f32 %v434, 0.5
    %v499 = vmul.f32 %v435, 0.5
    %v500 = vmul.f32 %v436, 0.5
    %v501 = vmul.f32 %v437, 0.5
    %v502 = vmul.f32 %v438, 0.5
    %v503 = vmul.f32 %v439, 0.5
    %v504 = vmul.f32 %v440, 0.5
    %v505 = vmul.f32 %v441, 0.5
    %v506 = vmul.f32 %v442, 0.5
    %v507 = vmul.f32 %v443, 0.5
    %v508 = vmul.f32 %v444, 0.5
    %v509 = vmul.f32 %v445, 0.5
    %v510 = vmul.f32 %v446, 0.5
    %v511 = vmul.f32 %v447, 0.5
    %v512 = vmul.f32 %v448, 0.5
    %v513 = vmul.f32 %v449, 0.5
    %v514 = vmul.f32 %v450, 0.5
    %v515 = vmul.f32 %v451, 0.5
    %v516 = vmul.f32 %v452, 0.5
    %v517 = vmul.f32 %v453, 0.5
    %v518 = vmul.f32 %v454, 0.5
    %v519 = vmul.f32 %v455, 0.5
    %v520 = vmul.f32 %v456, 0.5
    %v521 = vmul.f32 %v457, 0.5
    %v522 = vmul.f32 %v458, 0.5
    %v523 = vmul.f32 %v459, 0.5
    %v524 = vmul.f32 %v460, 0.5
    %v525 = vmul.f32 %v461, 0.5
    %v526 = vmul.f32 %v462, 0.5
    %v527 = vmul.f32 %v463, 0.5
    %v528 = vmul.f32 %v464, 0.5
    %v529 = vmul.f32 %v465, 0.5
    %v530 = vmul.f32 %v466, 0.5
    %v531 = vmul.f32 %v467, 0.5
    %v532 = vmul.f32 %v468, 0.5
    %v533 = vmul.f32 %v469, 0.5
    %v534 = vmul.f32 %v470, 0.5
    %v535 = vmul.f32 %v471, 0.5
    %v536 = vmul.f32 %v472, 0.5
    %v537 = vmul.f32 %v473, 0.5
    %v538 = vmul.f32 %v474, 0.5
    %v539 = vmul.f32 %v475, 0.5
    %v540 = vmul.f32 %v476, 0.5
    %v541 = vmul.f32 %v477, 0.5
    %v542 = vmul.f32 %v478, 0.5
    %v543 = vmul.f32 %v479, 0.5
    %v544 = vmul.f32 %v480, 0.5
    %v545 = vmul.f32 %v481, 0.5
    %v546 = vmul.f32 %v482, 0.5
    %v547 = vmul.f32 %v483, 0.5
    %v548 = vmul.f32 %v484, 0.5
    %v549 = vmul.f32 %v485, 0.5
    %v550 = vmul.f32 %v486, 0.5
    %v551 = vmul.f32 %v487, 0.5
    %v552 = vmul.f32 %v488, 0.5
    %v553 = vmul.f32 %v489, 0.5
    %v554 = vmul.f32 %v490, 0.5
    %v555 = vadd.f32 %v491, 0.5
    %v556 = vadd.f32 %v492, 0.5
    %v557 = vadd.f32 %v493, 0.5
    %v558 = vadd.f32 %v494, 0.5
    %v559 = vadd.f32 %v495, 0.5
    %v560 = vadd.f32 %v496, 0.5
    %v561 = vadd.f32 %v497, 0.5
    %v562 = vadd.f32 %v498, 0.5
    %v563 = vadd.f32 %v499, 0.5
    %v564 = vadd.f32 %v500, 0.5
    %v565 = vadd.f32 %v501, 0.5
    %v566 = vadd.f32 %v502, 0.5
    %v567 = vadd.f32 %v503, 0.5
    %v568 = vadd.f32 %v504, 0.5
    %v569 = vadd.f32 %v505, 0.5
    %v570 = vadd.f32 %v506, 0.5
    %v571 = vadd.f32 %v507, 0.5
    %v572 = vadd.f32 %v508, 0.5
    %v573 = vadd.f32 %v509, 0.5
    %v574 = vadd.f32 %v510, 0.5
    %v575 = vadd.f32 %v511, 0.5
    %v576 = vadd.f32 %v512, 0.5
    %v577 = vadd.f32 %v513, 0.5
    %v578 = vadd.f32 %v514, 0.5
    %v579 = vadd.f32 %v515, 0.5
    %v580 = vadd.f32 %v516, 0.5
    %v581 = vadd.f32 %v517, 0.5
    %v582 = vadd.f32 %v518, 0.5
    %v583 = vadd.f32 %v519, 0.5
    %v584 = vadd.f32 %v520, 0.5
    %v585 = vadd.f32 %v521, 0.5
    %v586 = vadd.f32 %v522, 0.5
    %v587 = vadd.f32 %v523, 0.5
    %v588 = vadd.f32 %v524, 0.5
    %v589 = vadd.f32 %v525, 0.5
    %v590 = vadd.f32 %v526, 0.5
    %v591 = vadd.f32 %v527, 0.5
    %v592 = vadd.f32 %v528, 0.5
    %v593 = vadd.f32 %v529, 0.5
    %v594 = vadd.f32 %v530, 0.5
    %v595 = vadd.f32 %v531, 0.5
    %v596 = vadd.f32 %v532, 0.5
    %v597 = vadd.f32 %v533, 0.5
    %v598 = vadd.f32 %v534, 0.5
    %v599 = vadd.f32 %v535, 0.5
    %v600 = vadd.f32 %v536, 0.5
    %v601 = vadd.f32 %v537, 0.5
    %v602 = vadd.f32 %v538, 0.5
    %v603 = vadd.f32 %v539, 0.5
    %v604 = vadd.f32 %v540, 0.5
    %v605 = vadd.f32 %v541, 0.5
    %v606 = vadd.f32 %v542, 0.5
    %v607 = vadd.f32 %v543, 0.5
    %v608 = vadd.f32 %v544, 0.5
    %v609 = vadd.f32 %v545, 0.5
    %v610 = vadd.f32 %v546, 0.5
    %v611 = vadd.f32 %v547, 0.5
    %v612 = vadd.f32 %v548, 0.5
    %v613 = vadd.f32 %v549, 0.5
    %v614 = vadd.f32 %v550, 0.5
    %v615 = vadd.f32 %v551, 0.5
    %v616 = vadd.f32 %v552, 0.5
    %v617 = vadd.f32 %v553, 0.5
    %v618 = vadd.f32 %v554, 0.5
    %619 = vst [vmem:[#allocation7] sm:$0xff] %v555
    %620 = vst [vmem:[#allocation7 + $0x8] sm:$0xff] %v556
    %621 = vst [vmem:[#allocation7 + $0x10] sm:$0xff] %v557
    %622 = vst [vmem:[#allocation7 + $0x18] sm:$0xff] %v558
    %623 = vst [vmem:[#allocation7 + $0x20] sm:$0xff] %v559
    %624 = vst [vmem:[#allocation7 + $0x28] sm:$0xff] %v560
    %625 = vst [vmem:[#allocation7 + $0x30] sm:$0xff] %v561
    %626 = vst [vmem:[#allocation7 + $0x38] sm:$0xff] %v562
    %627 = vst [vmem:[#allocation7 + $0x40] sm:$0xff] %v563
    %628 = vst [vmem:[#allocation7 + $0x48] sm:$0xff] %v564
    %629 = vst [vmem:[#allocation7 + $0x50] sm:$0xff] %v565
    %630 = vst [vmem:[#allocation7 + $0x58] sm:$0xff] %v566
    %631 = vst [vmem:[#allocation7 + $0x60] sm:$0xff] %v567
    %632 = vst [vmem:[#allocation7 + $0x68] sm:$0xff] %v568
    %633 = vst [vmem:[#allocation7 + $0x70] sm:$0xff] %v569
    %634 = vst [vmem:[#allocation7 + $0x78] sm:$0xff] %v570
    %635 = vst [vmem:[#allocation7 + $0x80] sm:$0xff] %v571
    %636 = vst [vmem:[#allocation7 + $0x88] sm:$0xff] %v572
    %637 = vst [vmem:[#allocation7 + $0x90] sm:$0xff] %v573
    %638 = vst [vmem:[#allocation7 + $0x98] sm:$0xff] %v574
    %639 = vst [vmem:[#allocation7 + $0xa0] sm:$0xff] %v575
    %640 = vst [vmem:[#allocation7 + $0xa8] sm:$0xff] %v576
    %641 = vst [vmem:[#allocation7 + $0xb0] sm:$0xff] %v577
    %642 = vst [vmem:[#allocation7 + $0xb8] sm:$0xff] %v578
    %643 = vst [vmem:[#allocation7 + $0xc0] sm:$0xff] %v579
    %644 = vst [vmem:[#allocation7 + $0xc8] sm:$0xff] %v580
    %645 = vst [vmem:[#allocation7 + $0xd0] sm:$0xff] %v581
    %646 = vst [vmem:[#allocation7 + $0xd8] sm:$0xff] %v582
    %647 = vst [vmem:[#allocation7 + $0xe0] sm:$0xff] %v583
    %648 = vst [vmem:[#allocation7 + $0xe8] sm:$0xff] %v584
    %649 = vst [vmem:[#allocation7 + $0xf0] sm:$0xff] %v585
    %650 = vst [vmem:[#allocation7 + $0xf8] sm:$0xff] %v586
    %651 = vst [vmem:[#allocation7 + $0x100] sm:$0xff] %v587
    %652 = vst [vmem:[#allocation7 + $0x108] sm:$0xff] %v588
    %653 = vst [vmem:[#allocation7 + $0x110] sm:$0xff] %v589
    %654 = vst [vmem:[#allocation7 + $0x118] sm:$0xff] %v590
    %655 = vst [vmem:[#allocation7 + $0x120] sm:$0xff] %v591
    %656 = vst [vmem:[#allocation7 + $0x128] sm:$0xff] %v592
    %657 = vst [vmem:[#allocation7 + $0x130] sm:$0xff] %v593
    %658 = vst [vmem:[#allocation7 + $0x138] sm:$0xff] %v594
    %659 = vst [vmem:[#allocation7 + $0x140] sm:$0xff] %v595
    %660 = vst [vmem:[#allocation7 + $0x148] sm:$0xff] %v596
    %661 = vst [vmem:[#allocation7 + $0x150] sm:$0xff] %v597
    %662 = vst [vmem:[#allocation7 + $0x158] sm:$0xff] %v598
    %663 = vst [vmem:[#allocation7 + $0x160] sm:$0xff] %v599
    %664 = vst [vmem:[#allocation7 + $0x168] sm:$0xff] %v600
    %665 = vst [vmem:[#allocation7 + $0x170] sm:$0xff] %v601
    %666 = vst [vmem:[#allocation7 + $0x178] sm:$0xff] %v602
    %667 = vst [vmem:[#allocation7 + $0x180] sm:$0xff] %v603
    %668 = vst [vmem:[#allocation7 + $0x188] sm:$0xff] %v604
    %669 = vst [vmem:[#allocation7 + $0x190] sm:$0xff] %v605
    %670 = vst [vmem:[#allocation7 + $0x198] sm:$0xff] %v606
    %671 = vst [vmem:[#allocation7 + $0x1a0] sm:$0xff] %v607
    %672 = vst [vmem:[#allocation7 + $0x1a8] sm:$0xff] %v608
    %673 = vst [vmem:[#allocation7 + $0x1b0] sm:$0xff] %v609
    %674 = vst [vmem:[#allocation7 + $0x1b8] sm:$0xff] %v610
    %675 = vst [vmem:[#allocation7 + $0x1c0] sm:$0xff] %v611
    %676 = vst [vmem:[#allocation7 + $0x1c8] sm:$0xff] %v612
    %677 = vst [vmem:[#allocation7 + $0x1d0] sm:$0xff] %v613
    %678 = vst [vmem:[#allocation7 + $0x1d8] sm:$0xff] %v614
    %679 = vst [vmem:[#allocation7 + $0x1e0] sm:$0xff] %v615
    %680 = vst [vmem:[#allocation7 + $0x1e8] sm:$0xff] %v616
    %681 = vst [vmem:[#allocation7 + $0x1f0] sm:$0xff] %v617
    %682 = vst [vmem:[#allocation7 + $0x1f8] sm:$0xff] %v618
    // Predicated region
    $region18: #{tpu_custom_call.1} parent=1 // pred_check
      _
    $region19: #{tpu_custom_call.1} parent=1 // pred_check_branch
      %684 = sbr.rel (0) target = $region21
    $region20: #{tpu_custom_call.1} parent=1 // pred_region
      %s686 = ssub.s32 8192, 8192
      %687 = vsyncadd [#allocation4], %s686
      %s688 = sshll.u32 [#allocation7], 4
      %s689 = int_to_ptr.vmem [resolvable:$true] %s688
      %694 = dma.vmem_to_hbm [thread:$0]  %s689, 8192, %s2, [#allocation4], 256, 256, 16
    $region21: #{tpu_custom_call.1} parent=1 // pred_fallthru
      _
    // Predicated region
    $region22: #{tpu_custom_call.1} parent=1 // pred_check
      _
    $region23: #{tpu_custom_call.1} parent=1 // pred_check_branch
      %696 = sbr.rel (0) target = $region25
    $region24: #{tpu_custom_call.1} parent=1 // pred_region
      %697 = dma.done [#allocation4], 8192
    $region25: #{tpu_custom_call.1} parent=1 // pred_fallthru
      _
    %698 = vsyncpa [#allocation3], 1
    %699 = vsyncpa [#allocation6], 1
    %700 = vsyncpa [#allocation4], 1

// kernel: tpu_custom_call.1
$region0: #{tpu_custom_call.1}
  #allocation0 [shape = 'u32[]', space=smem, size = 0x4, offset = 0x4, fixed_abs, tag = 'smem constant byte address 0x4 - core index']
  #allocation1 [shape = 'u32[144,128]{1,0:T(1,128)}', space=vmem, size = 0x12000, scoped, tag = 'internal scratch']
  %s0 = inlined_call_operand.hbm [shape: f32[256,128], index: 0, kind: input, shape index: {}]
  %s1 = inlined_call_operand.hbm [shape: f32[256,128], index: 1, kind: input, shape index: {}]
  %s2 = inlined_call_operand.hbm [shape: f32[256,256], index: 2, kind: output, shape index: {}]
  %s3 = sld [smem:[#allocation0]]
  $region26: #{tpu_custom_call.1} parent=0
    _
  %s5 = ssub.s32 1, %s3
  %s6 = scalar_select 0, %s5, %s3
  $region1: #{tpu_custom_call.1} parent=0
    #allocation2 [shape = 'u8[131072]{0}', space=vmem, size = 0x20000, scoped, tag = 'input window, operand 0, single buffered']
    #allocation3 [shape = 's32[1]{0}', space=sflag, size = 0x4, scoped, tag = 'scoped memory for tpu_custom_call.1']
    #allocation4 [shape = 's32[1]{0}', space=sflag, size = 0x4, scoped, tag = 'scoped memory for tpu_custom_call.1']
    #allocation5 [shape = 'u8[131072]{0}', space=vmem, size = 0x20000, scoped, tag = 'input window, operand 1, single buffered']
    #allocation6 [shape = 's32[1]{0}', space=sflag, size = 0x4, scoped, tag = 'scoped memory for tpu_custom_call.1']
    #allocation7 [shape = 'u8[262144]{0}', space=vmem, size = 0x40000, scoped, tag = 'output window, operand 0, single buffered']
    %7 = vsyncpa [#allocation3], 0
    %8 = vsyncpa [#allocation6], 0
    %9 = vsyncpa [#allocation4], 0
    // Predicated region
    $region2: #{tpu_custom_call.1} parent=1 // pred_check
      _
    $region3: #{tpu_custom_call.1} parent=1 // pred_check_branch
      %11 = sbr.rel (0) target = $region5
    $region4: #{tpu_custom_call.1} parent=1 // pred_region
      %s13 = ssub.s32 4096, 4096
      %14 = vsyncadd [#allocation3], %s13
      %s15 = sshll.u32 [#allocation2], 4
      %s16 = int_to_ptr.vmem [resolvable:$true] %s15
      %21 = dma.hbm_to_vmem [thread:$0]  %s0, 4096, %s16, [#allocation3], 128, 128, 8
    $region5: #{tpu_custom_call.1} parent=1 // pred_fallthru
      _
    // Predicated region
    $region6: #{tpu_custom_call.1} parent=1 // pred_check
      _
    $region7: #{tpu_custom_call.1} parent=1 // pred_check_branch
      %23 = sbr.rel (0) target = $region9
    $region8: #{tpu_custom_call.1} parent=1 // pred_region
      %s25 = ssub.s32 4096, 4096
      %26 = vsyncadd [#allocation6], %s25
      %s27 = sshll.u32 [#allocation5], 4
      %s28 = int_to_ptr.vmem [resolvable:$true] %s27
      %33 = dma.hbm_to_vmem [thread:$0]  %s1, 4096, %s28, [#allocation6], 128, 128, 8
    $region9: #{tpu_custom_call.1} parent=1 // pred_fallthru
      _
    // Predicated region
    $region10: #{tpu_custom_call.1} parent=1 // pred_check
      _
    $region11: #{tpu_custom_call.1} parent=1 // pred_check_branch
      %35 = sbr.rel (0) target = $region13
    $region12: #{tpu_custom_call.1} parent=1 // pred_region
      %36 = dma.done [#allocation3], 4096
    $region13: #{tpu_custom_call.1} parent=1 // pred_fallthru
      _
    // Predicated region
    $region14: #{tpu_custom_call.1} parent=1 // pred_check
      _
    $region15: #{tpu_custom_call.1} parent=1 // pred_check_branch
      %38 = sbr.rel (0) target = $region17
    $region16: #{tpu_custom_call.1} parent=1 // pred_region
      %39 = dma.done [#allocation6], 4096
    $region17: #{tpu_custom_call.1} parent=1 // pred_fallthru
      _
    %s40 = smul.u32 0, 256
    %s41 = scalar_lea.vmem [#allocation5], %s40
    %v42 = vld [vmem:[%s41] sm:$0xff]
    %v43 = vld [vmem:[%s41 + $0x8] sm:$0xff]
    %v44 = vld [vmem:[%s41 + $0x10] sm:$0xff]
    %v45 = vld [vmem:[%s41 + $0x18] sm:$0xff]
    %v46 = vld [vmem:[%s41 + $0x20] sm:$0xff]
    %v47 = vld [vmem:[%s41 + $0x28] sm:$0xff]
    %v48 = vld [vmem:[%s41 + $0x30] sm:$0xff]
    %v49 = vld [vmem:[%s41 + $0x38] sm:$0xff]
    %v50 = vld [vmem:[%s41 + $0x40] sm:$0xff]
    %v51 = vld [vmem:[%s41 + $0x48] sm:$0xff]
    %v52 = vld [vmem:[%s41 + $0x50] sm:$0xff]
    %v53 = vld [vmem:[%s41 + $0x58] sm:$0xff]
    %v54 = vld [vmem:[%s41 + $0x60] sm:$0xff]
    %v55 = vld [vmem:[%s41 + $0x68] sm:$0xff]
    %v56 = vld [vmem:[%s41 + $0x70] sm:$0xff]
    %v57 = vld [vmem:[%s41 + $0x78] sm:$0xff]
    %v58 = vld [vmem:[%s41 + $0x80] sm:$0xff]
    %v59 = vld [vmem:[%s41 + $0x88] sm:$0xff]
    %v60 = vld [vmem:[%s41 + $0x90] sm:$0xff]
    %v61 = vld [vmem:[%s41 + $0x98] sm:$0xff]
    %v62 = vld [vmem:[%s41 + $0xa0] sm:$0xff]
    %v63 = vld [vmem:[%s41 + $0xa8] sm:$0xff]
    %v64 = vld [vmem:[%s41 + $0xb0] sm:$0xff]
    %v65 = vld [vmem:[%s41 + $0xb8] sm:$0xff]
    %v66 = vld [vmem:[%s41 + $0xc0] sm:$0xff]
    %v67 = vld [vmem:[%s41 + $0xc8] sm:$0xff]
    %v68 = vld [vmem:[%s41 + $0xd0] sm:$0xff]
    %v69 = vld [vmem:[%s41 + $0xd8] sm:$0xff]
    %v70 = vld [vmem:[%s41 + $0xe0] sm:$0xff]
    %v71 = vld [vmem:[%s41 + $0xe8] sm:$0xff]
    %v72 = vld [vmem:[%s41 + $0xf0] sm:$0xff]
    %v73 = vld [vmem:[%s41 + $0xf8] sm:$0xff]
    %v74 = vld [vmem:[#allocation2] sm:$0xff]
    %v75 = vld [vmem:[#allocation2 + $0x8] sm:$0xff]
    %v76 = vld [vmem:[#allocation2 + $0x10] sm:$0xff]
    %v77 = vld [vmem:[#allocation2 + $0x18] sm:$0xff]
    %v78 = vld [vmem:[#allocation2 + $0x20] sm:$0xff]
    %v79 = vld [vmem:[#allocation2 + $0x28] sm:$0xff]
    %v80 = vld [vmem:[#allocation2 + $0x30] sm:$0xff]
    %v81 = vld [vmem:[#allocation2 + $0x38] sm:$0xff]
    %v82 = vld [vmem:[#allocation2 + $0x40] sm:$0xff]
    %v83 = vld [vmem:[#allocation2 + $0x48] sm:$0xff]
    %v84 = vld [vmem:[#allocation2 + $0x50] sm:$0xff]
    %v85 = vld [vmem:[#allocation2 + $0x58] sm:$0xff]
    %v86 = vld [vmem:[#allocation2 + $0x60] sm:$0xff]
    %v87 = vld [vmem:[#allocation2 + $0x68] sm:$0xff]
    %v88 = vld [vmem:[#allocation2 + $0x70] sm:$0xff]
    %v89 = vld [vmem:[#allocation2 + $0x78] sm:$0xff]
    %v90 = vld [vmem:[#allocation2 + $0x80] sm:$0xff]
    %v91 = vld [vmem:[#allocation2 + $0x88] sm:$0xff]
    %v92 = vld [vmem:[#allocation2 + $0x90] sm:$0xff]
    %v93 = vld [vmem:[#allocation2 + $0x98] sm:$0xff]
    %v94 = vld [vmem:[#allocation2 + $0xa0] sm:$0xff]
    %v95 = vld [vmem:[#allocation2 + $0xa8] sm:$0xff]
    %v96 = vld [vmem:[#allocation2 + $0xb0] sm:$0xff]
    %v97 = vld [vmem:[#allocation2 + $0xb8] sm:$0xff]
    %v98 = vld [vmem:[#allocation2 + $0xc0] sm:$0xff]
    %v99 = vld [vmem:[#allocation2 + $0xc8] sm:$0xff]
    %v100 = vld [vmem:[#allocation2 + $0xd0] sm:$0xff]
    %v101 = vld [vmem:[#allocation2 + $0xd8] sm:$0xff]
    %v102 = vld [vmem:[#allocation2 + $0xe0] sm:$0xff]
    %v103 = vld [vmem:[#allocation2 + $0xe8] sm:$0xff]
    %v104 = vld [vmem:[#allocation2 + $0xf0] sm:$0xff]
    %v105 = vld [vmem:[#allocation2 + $0xf8] sm:$0xff]
    %106 = vmatprep.subr.mxu0 0.0
    %107 = vmatpush1.xpose.msra.mxu0 %v42
    %108 = vmatprep.subr.mxu0 0.0
    %109 = vmatpush1.xpose.msra.mxu0 %v43
    %110 = vmatprep.subr.mxu0 0.0
    %111 = vmatpush1.xpose.msra.mxu0 %v44
    %112 = vmatprep.subr.mxu0 0.0
    %113 = vmatpush1.xpose.msra.mxu0 %v45
    %114 = vmatprep.subr.mxu0 0.0
    %115 = vmatpush1.xpose.msra.mxu0 %v46
    %116 = vmatprep.subr.mxu0 0.0
    %117 = vmatpush1.xpose.msra.mxu0 %v47
    %118 = vmatprep.subr.mxu0 0.0
    %119 = vmatpush1.xpose.msra.mxu0 %v48
    %120 = vmatprep.subr.mxu0 0.0
    %121 = vmatpush1.xpose.msra.mxu0 %v49
    %122 = vmatprep.subr.mxu0 0.0
    %123 = vmatpush1.xpose.msra.mxu0 %v50
    %124 = vmatprep.subr.mxu0 0.0
    %125 = vmatpush1.xpose.msra.mxu0 %v51
    %126 = vmatprep.subr.mxu0 0.0
    %127 = vmatpush1.xpose.msra.mxu0 %v52
    %128 = vmatprep.subr.mxu0 0.0
    %129 = vmatpush1.xpose.msra.mxu0 %v53
    %130 = vmatprep.subr.mxu0 0.0
    %131 = vmatpush1.xpose.msra.mxu0 %v54
    %132 = vmatprep.subr.mxu0 0.0
    %133 = vmatpush1.xpose.msra.mxu0 %v55
    %134 = vmatprep.subr.mxu0 0.0
    %135 = vmatpush1.xpose.msra.mxu0 %v56
    %136 = vmatprep.subr.mxu0 0.0
    %137 = vmatpush1.xpose.msra.mxu0 %v57
    %138 = vmatprep.subr.mxu0 0.0
    %139 = vmatpush1.xpose.msra.mxu0 %v58
    %140 = vmatprep.subr.mxu0 0.0
    %141 = vmatpush1.xpose.msra.mxu0 %v59
    %142 = vmatprep.subr.mxu0 0.0
    %143 = vmatpush1.xpose.msra.mxu0 %v60
    %144 = vmatprep.subr.mxu0 0.0
    %145 = vmatpush1.xpose.msra.mxu0 %v61
    %146 = vmatprep.subr.mxu0 0.0
    %147 = vmatpush1.xpose.msra.mxu0 %v62
    %148 = vmatprep.subr.mxu0 0.0
    %149 = vmatpush1.xpose.msra.mxu0 %v63
    %150 = vmatprep.subr.mxu0 0.0
    %151 = vmatpush1.xpose.msra.mxu0 %v64
    %152 = vmatprep.subr.mxu0 0.0
    %153 = vmatpush1.xpose.msra.mxu0 %v65
    %154 = vmatprep.subr.mxu0 0.0
    %155 = vmatpush1.xpose.msra.mxu0 %v66
    %156 = vmatprep.subr.mxu0 0.0
    %157 = vmatpush1.xpose.msra.mxu0 %v67
    %158 = vmatprep.subr.mxu0 0.0
    %159 = vmatpush1.xpose.msra.mxu0 %v68
    %160 = vmatprep.subr.mxu0 0.0
    %161 = vmatpush1.xpose.msra.mxu0 %v69
    %162 = vmatprep.subr.mxu0 0.0
    %163 = vmatpush1.xpose.msra.mxu0 %v70
    %164 = vmatprep.subr.mxu0 0.0
    %165 = vmatpush1.xpose.msra.mxu0 %v71
    %166 = vmatprep.subr.mxu0 0.0
    %167 = vmatpush1.xpose.msra.mxu0 %v72
    %168 = vmatprep.subr.mxu0 0.0
    %169 = vmatpush1.xpose.msra.mxu0 %v73
    %170 = vmatprep.mubr.f32.mxu0 0.0
    %171 = vmatmul.mubr.f32.gmra.mrb[0].mxu0 %v74
    %v172 = vpop.f32.mrb[0].mxu0
    %v173 = vadd.f32 0.0, %v172
    %v174 = vpop.f32.mrb[0].mxu0
    %v175 = vadd.f32 0.0, %v174
    %176 = vmatprep.mubr.f32.mxu0 0.0
    %177 = vmatmul.mubr.f32.gmra.mrb[0].mxu0 %v75
    %v178 = vpop.f32.mrb[0].mxu0
    %v179 = vadd.f32 0.0, %v178
    %v180 = vpop.f32.mrb[0].mxu0
    %v181 = vadd.f32 0.0, %v180
    %182 = vmatprep.mubr.f32.mxu0 0.0
    %183 = vmatmul.mubr.f32.gmra.mrb[0].mxu0 %v76
    %v184 = vpop.f32.mrb[0].mxu0
    %v185 = vadd.f32 0.0, %v184
    %v186 = vpop.f32.mrb[0].mxu0
    %v187 = vadd.f32 0.0, %v186
    %188 = vmatprep.mubr.f32.mxu0 0.0
    %189 = vmatmul.mubr.f32.gmra.mrb[0].mxu0 %v77
    %v190 = vpop.f32.mrb[0].mxu0
    %v191 = vadd.f32 0.0, %v190
    %v192 = vpop.f32.mrb[0].mxu0
    %v193 = vadd.f32 0.0, %v192
    %194 = vmatprep.mubr.f32.mxu0 0.0
    %195 = vmatmul.mubr.f32.gmra.mrb[0].mxu0 %v78
    %v196 = vpop.f32.mrb[0].mxu0
    %v197 = vadd.f32 0.0, %v196
    %v198 = vpop.f32.mrb[0].mxu0
    %v199 = vadd.f32 0.0, %v198
    %200 = vmatprep.mubr.f32.mxu0 0.0
    %201 = vmatmul.mubr.f32.gmra.mrb[0].mxu0 %v79
    %v202 = vpop.f32.mrb[0].mxu0
    %v203 = vadd.f32 0.0, %v202
    %v204 = vpop.f32.mrb[0].mxu0
    %v205 = vadd.f32 0.0, %v204
    %206 = vmatprep.mubr.f32.mxu0 0.0
    %207 = vmatmul.mubr.f32.gmra.mrb[0].mxu0 %v80
    %v208 = vpop.f32.mrb[0].mxu0
    %v209 = vadd.f32 0.0, %v208
    %v210 = vpop.f32.mrb[0].mxu0
    %v211 = vadd.f32 0.0, %v210
    %212 = vmatprep.mubr.f32.mxu0 0.0
    %213 = vmatmul.mubr.f32.gmra.mrb[0].mxu0 %v81
    %v214 = vpop.f32.mrb[0].mxu0
    %v215 = vadd.f32 0.0, %v214
    %v216 = vpop.f32.mrb[0].mxu0
    %v217 = vadd.f32 0.0, %v216
    %218 = vmatprep.mubr.f32.mxu0 0.0
    %219 = vmatmul.mubr.f32.gmra.mrb[0].mxu0 %v82
    %v220 = vpop.f32.mrb[0].mxu0
    %v221 = vadd.f32 0.0, %v220
    %v222 = vpop.f32.mrb[0].mxu0
    %v223 = vadd.f32 0.0, %v222
    %224 = vmatprep.mubr.f32.mxu0 0.0
    %225 = vmatmul.mubr.f32.gmra.mrb[0].mxu0 %v83
    %v226 = vpop.f32.mrb[0].mxu0
    %v227 = vadd.f32 0.0, %v226
    %v228 = vpop.f32.mrb[0].mxu0
    %v229 = vadd.f32 0.0, %v228
    %230 = vmatprep.mubr.f32.mxu0 0.0
    %231 = vmatmul.mubr.f32.gmra.mrb[0].mxu0 %v84
    %v232 = vpop.f32.mrb[0].mxu0
    %v233 = vadd.f32 0.0, %v232
    %v234 = vpop.f32.mrb[0].mxu0
    %v235 = vadd.f32 0.0, %v234
    %236 = vmatprep.mubr.f32.mxu0 0.0
    %237 = vmatmul.mubr.f32.gmra.mrb[0].mxu0 %v85
    %v238 = vpop.f32.mrb[0].mxu0
    %v239 = vadd.f32 0.0, %v238
    %v240 = vpop.f32.mrb[0].mxu0
    %v241 = vadd.f32 0.0, %v240
    %242 = vmatprep.mubr.f32.mxu0 0.0
    %243 = vmatmul.mubr.f32.gmra.mrb[0].mxu0 %v86
    %v244 = vpop.f32.mrb[0].mxu0
    %v245 = vadd.f32 0.0, %v244
    %v246 = vpop.f32.mrb[0].mxu0
    %v247 = vadd.f32 0.0, %v246
    %248 = vmatprep.mubr.f32.mxu0 0.0
    %249 = vmatmul.mubr.f32.gmra.mrb[0].mxu0 %v87
    %v250 = vpop.f32.mrb[0].mxu0
    %v251 = vadd.f32 0.0, %v250
    %v252 = vpop.f32.mrb[0].mxu0
    %v253 = vadd.f32 0.0, %v252
    %254 = vmatprep.mubr.f32.mxu0 0.0
    %255 = vmatmul.mubr.f32.gmra.mrb[0].mxu0 %v88
    %v256 = vpop.f32.mrb[0].mxu0
    %v257 = vadd.f32 0.0, %v256
    %v258 = vpop.f32.mrb[0].mxu0
    %v259 = vadd.f32 0.0, %v258
    %260 = vmatprep.mubr.f32.mxu0 0.0
    %261 = vmatmul.mubr.f32.gmra.mrb[0].mxu0 %v89
    %v262 = vpop.f32.mrb[0].mxu0
    %v263 = vadd.f32 0.0, %v262
    %v264 = vpop.f32.mrb[0].mxu0
    %v265 = vadd.f32 0.0, %v264
    %266 = vmatprep.mubr.f32.mxu0 0.0
    %267 = vmatmul.mubr.f32.gmra.mrb[0].mxu0 %v90
    %v268 = vpop.f32.mrb[0].mxu0
    %v269 = vadd.f32 0.0, %v268
    %v270 = vpop.f32.mrb[0].mxu0
    %v271 = vadd.f32 0.0, %v270
    %272 = vmatprep.mubr.f32.mxu0 0.0
    %273 = vmatmul.mubr.f32.gmra.mrb[0].mxu0 %v91
    %v274 = vpop.f32.mrb[0].mxu0
    %v275 = vadd.f32 0.0, %v274
    %v276 = vpop.f32.mrb[0].mxu0
    %v277 = vadd.f32 0.0, %v276
    %278 = vmatprep.mubr.f32.mxu0 0.0
    %279 = vmatmul.mubr.f32.gmra.mrb[0].mxu0 %v92
    %v280 = vpop.f32.mrb[0].mxu0
    %v281 = vadd.f32 0.0, %v280
    %v282 = vpop.f32.mrb[0].mxu0
    %v283 = vadd.f32 0.0, %v282
    %284 = vmatprep.mubr.f32.mxu0 0.0
    %285 = vmatmul.mubr.f32.gmra.mrb[0].mxu0 %v93
    %v286 = vpop.f32.mrb[0].mxu0
    %v287 = vadd.f32 0.0, %v286
    %v288 = vpop.f32.mrb[0].mxu0
    %v289 = vadd.f32 0.0, %v288
    %290 = vmatprep.mubr.f32.mxu0 0.0
    %291 = vmatmul.mubr.f32.gmra.mrb[0].mxu0 %v94
    %v292 = vpop.f32.mrb[0].mxu0
    %v293 = vadd.f32 0.0, %v292
    %v294 = vpop.f32.mrb[0].mxu0
    %v295 = vadd.f32 0.0, %v294
    %296 = vmatprep.mubr.f32.mxu0 0.0
    %297 = vmatmul.mubr.f32.gmra.mrb[0].mxu0 %v95
    %v298 = vpop.f32.mrb[0].mxu0
    %v299 = vadd.f32 0.0, %v298
    %v300 = vpop.f32.mrb[0].mxu0
    %v301 = vadd.f32 0.0, %v300
    %302 = vmatprep.mubr.f32.mxu0 0.0
    %303 = vmatmul.mubr.f32.gmra.mrb[0].mxu0 %v96
    %v304 = vpop.f32.mrb[0].mxu0
    %v305 = vadd.f32 0.0, %v304
    %v306 = vpop.f32.mrb[0].mxu0
    %v307 = vadd.f32 0.0, %v306
    %308 = vmatprep.mubr.f32.mxu0 0.0
    %309 = vmatmul.mubr.f32.gmra.mrb[0].mxu0 %v97
    %v310 = vpop.f32.mrb[0].mxu0
    %v311 = vadd.f32 0.0, %v310
    %v312 = vpop.f32.mrb[0].mxu0
    %v313 = vadd.f32 0.0, %v312
    %314 = vmatprep.mubr.f32.mxu0 0.0
    %315 = vmatmul.mubr.f32.gmra.mrb[0].mxu0 %v98
    %v316 = vpop.f32.mrb[0].mxu0
    %v317 = vadd.f32 0.0, %v316
    %v318 = vpop.f32.mrb[0].mxu0
    %v319 = vadd.f32 0.0, %v318
    %320 = vmatprep.mubr.f32.mxu0 0.0
    %321 = vmatmul.mubr.f32.gmra.mrb[0].mxu0 %v99
    %v322 = vpop.f32.mrb[0].mxu0
    %v323 = vadd.f32 0.0, %v322
    %v324 = vpop.f32.mrb[0].mxu0
    %v325 = vadd.f32 0.0, %v324
    %326 = vmatprep.mubr.f32.mxu0 0.0
    %327 = vmatmul.mubr.f32.gmra.mrb[0].mxu0 %v100
    %v328 = vpop.f32.mrb[0].mxu0
    %v329 = vadd.f32 0.0, %v328
    %v330 = vpop.f32.mrb[0].mxu0
    %v331 = vadd.f32 0.0, %v330
    %332 = vmatprep.mubr.f32.mxu0 0.0
    %333 = vmatmul.mubr.f32.gmra.mrb[0].mxu0 %v101
    %v334 = vpop.f32.mrb[0].mxu0
    %v335 = vadd.f32 0.0, %v334
    %v336 = vpop.f32.mrb[0].mxu0
    %v337 = vadd.f32 0.0, %v336
    %338 = vmatprep.mubr.f32.mxu0 0.0
    %339 = vmatmul.mubr.f32.gmra.mrb[0].mxu0 %v102
    %v340 = vpop.f32.mrb[0].mxu0
    %v341 = vadd.f32 0.0, %v340
    %v342 = vpop.f32.mrb[0].mxu0
    %v343 = vadd.f32 0.0, %v342
    %344 = vmatprep.mubr.f32.mxu0 0.0
    %345 = vmatmul.mubr.f32.gmra.mrb[0].mxu0 %v103
    %v346 = vpop.f32.mrb[0].mxu0
    %v347 = vadd.f32 0.0, %v346
    %v348 = vpop.f32.mrb[0].mxu0
    %v349 = vadd.f32 0.0, %v348
    %350 = vmatprep.mubr.f32.mxu0 0.0
    %351 = vmatmul.mubr.f32.gmra.mrb[0].mxu0 %v104
    %v352 = vpop.f32.mrb[0].mxu0
    %v353 = vadd.f32 0.0, %v352
    %v354 = vpop.f32.mrb[0].mxu0
    %v355 = vadd.f32 0.0, %v354
    %356 = vmatprep.mubr.f32.mxu0 0.0
    %357 = vmatmul.mubr.f32.gmra.mrb[0].mxu0 %v105
    %v358 = vpop.f32.mrb[0].mxu0
    %v359 = vadd.f32 0.0, %v358
    %v360 = vpop.f32.mrb[0].mxu0
    %v361 = vadd.f32 0.0, %v360
    %362 = vdwg.mxu0
    %v363 = vmul.f32 %v173, 0.5
    %v364 = vmul.f32 %v175, 0.5
    %v365 = vmul.f32 %v179, 0.5
    %v366 = vmul.f32 %v181, 0.5
    %v367 = vmul.f32 %v185, 0.5
    %v368 = vmul.f32 %v187, 0.5
    %v369 = vmul.f32 %v191, 0.5
    %v370 = vmul.f32 %v193, 0.5
    %v371 = vmul.f32 %v197, 0.5
    %v372 = vmul.f32 %v199, 0.5
    %v373 = vmul.f32 %v203, 0.5
    %v374 = vmul.f32 %v205, 0.5
    %v375 = vmul.f32 %v209, 0.5
    %v376 = vmul.f32 %v211, 0.5
    %v377 = vmul.f32 %v215, 0.5
    %v378 = vmul.f32 %v217, 0.5
    %v379 = vmul.f32 %v221, 0.5
    %v380 = vmul.f32 %v223, 0.5
    %v381 = vmul.f32 %v227, 0.5
    %v382 = vmul.f32 %v229, 0.5
    %v383 = vmul.f32 %v233, 0.5
    %v384 = vmul.f32 %v235, 0.5
    %v385 = vmul.f32 %v239, 0.5
    %v386 = vmul.f32 %v241, 0.5
    %v387 = vmul.f32 %v245, 0.5
    %v388 = vmul.f32 %v247, 0.5
    %v389 = vmul.f32 %v251, 0.5
    %v390 = vmul.f32 %v253, 0.5
    %v391 = vmul.f32 %v257, 0.5
    %v392 = vmul.f32 %v259, 0.5
    %v393 = vmul.f32 %v263, 0.5
    %v394 = vmul.f32 %v265, 0.5
    %v395 = vmul.f32 %v269, 0.5
    %v396 = vmul.f32 %v271, 0.5
    %v397 = vmul.f32 %v275, 0.5
    %v398 = vmul.f32 %v277, 0.5
    %v399 = vmul.f32 %v281, 0.5
    %v400 = vmul.f32 %v283, 0.5
    %v401 = vmul.f32 %v287, 0.5
    %v402 = vmul.f32 %v289, 0.5
    %v403 = vmul.f32 %v293, 0.5
    %v404 = vmul.f32 %v295, 0.5
    %v405 = vmul.f32 %v299, 0.5
    %v406 = vmul.f32 %v301, 0.5
    %v407 = vmul.f32 %v305, 0.5
    %v408 = vmul.f32 %v307, 0.5
    %v409 = vmul.f32 %v311, 0.5
    %v410 = vmul.f32 %v313, 0.5
    %v411 = vmul.f32 %v317, 0.5
    %v412 = vmul.f32 %v319, 0.5
    %v413 = vmul.f32 %v323, 0.5
    %v414 = vmul.f32 %v325, 0.5
    %v415 = vmul.f32 %v329, 0.5
    %v416 = vmul.f32 %v331, 0.5
    %v417 = vmul.f32 %v335, 0.5
    %v418 = vmul.f32 %v337, 0.5
    %v419 = vmul.f32 %v341, 0.5
    %v420 = vmul.f32 %v343, 0.5
    %v421 = vmul.f32 %v347, 0.5
    %v422 = vmul.f32 %v349, 0.5
    %v423 = vmul.f32 %v353, 0.5
    %v424 = vmul.f32 %v355, 0.5
    %v425 = vmul.f32 %v359, 0.5
    %v426 = vmul.f32 %v361, 0.5
    %v427 = vtanh.pop %v363
    %v428 = vtanh.pop %v364
    %v429 = vtanh.pop %v365
    %v430 = vtanh.pop %v366
    %v431 = vtanh.pop %v367
    %v432 = vtanh.pop %v368
    %v433 = vtanh.pop %v369
    %v434 = vtanh.pop %v370
    %v435 = vtanh.pop %v371
    %v436 = vtanh.pop %v372
    %v437 = vtanh.pop %v373
    %v438 = vtanh.pop %v374
    %v439 = vtanh.pop %v375
    %v440 = vtanh.pop %v376
    %v441 = vtanh.pop %v377
    %v442 = vtanh.pop %v378
    %v443 = vtanh.pop %v379
    %v444 = vtanh.pop %v380
    %v445 = vtanh.pop %v381
    %v446 = vtanh.pop %v382
    %v447 = vtanh.pop %v383
    %v448 = vtanh.pop %v384
    %v449 = vtanh.pop %v385
    %v450 = vtanh.pop %v386
    %v451 = vtanh.pop %v387
    %v452 = vtanh.pop %v388
    %v453 = vtanh.pop %v389
    %v454 = vtanh.pop %v390
    %v455 = vtanh.pop %v391
    %v456 = vtanh.pop %v392
    %v457 = vtanh.pop %v393
    %v458 = vtanh.pop %v394
    %v459 = vtanh.pop %v395
    %v460 = vtanh.pop %v396
    %v461 = vtanh.pop %v397
    %v462 = vtanh.pop %v398
    %v463 = vtanh.pop %v399
    %v464 = vtanh.pop %v400
    %v465 = vtanh.pop %v401
    %v466 = vtanh.pop %v402
    %v467 = vtanh.pop %v403
    %v468 = vtanh.pop %v404
    %v469 = vtanh.pop %v405
    %v470 = vtanh.pop %v406
    %v471 = vtanh.pop %v407
    %v472 = vtanh.pop %v408
    %v473 = vtanh.pop %v409
    %v474 = vtanh.pop %v410
    %v475 = vtanh.pop %v411
    %v476 = vtanh.pop %v412
    %v477 = vtanh.pop %v413
    %v478 = vtanh.pop %v414
    %v479 = vtanh.pop %v415
    %v480 = vtanh.pop %v416
    %v481 = vtanh.pop %v417
    %v482 = vtanh.pop %v418
    %v483 = vtanh.pop %v419
    %v484 = vtanh.pop %v420
    %v485 = vtanh.pop %v421
    %v486 = vtanh.pop %v422
    %v487 = vtanh.pop %v423
    %v488 = vtanh.pop %v424
    %v489 = vtanh.pop %v425
    %v490 = vtanh.pop %v426
    %v491 = vmul.f32 %v427, 0.5
    %v492 = vmul.f32 %v428, 0.5
    %v493 = vmul.f32 %v429, 0.5
    %v494 = vmul.f32 %v430, 0.5
    %v495 = vmul.f32 %v431, 0.5
    %v496 = vmul.f32 %v432, 0.5
    %v497 = vmul.f32 %v433, 0.5
    %v498 = vmul.f32 %v434, 0.5
    %v499 = vmul.f32 %v435, 0.5
    %v500 = vmul.f32 %v436, 0.5
    %v501 = vmul.f32 %v437, 0.5
    %v502 = vmul.f32 %v438, 0.5
    %v503 = vmul.f32 %v439, 0.5
    %v504 = vmul.f32 %v440, 0.5
    %v505 = vmul.f32 %v441, 0.5
    %v506 = vmul.f32 %v442, 0.5
    %v507 = vmul.f32 %v443, 0.5
    %v508 = vmul.f32 %v444, 0.5
    %v509 = vmul.f32 %v445, 0.5
    %v510 = vmul.f32 %v446, 0.5
    %v511 = vmul.f32 %v447, 0.5
    %v512 = vmul.f32 %v448, 0.5
    %v513 = vmul.f32 %v449, 0.5
    %v514 = vmul.f32 %v450, 0.5
    %v515 = vmul.f32 %v451, 0.5
    %v516 = vmul.f32 %v452, 0.5
    %v517 = vmul.f32 %v453, 0.5
    %v518 = vmul.f32 %v454, 0.5
    %v519 = vmul.f32 %v455, 0.5
    %v520 = vmul.f32 %v456, 0.5
    %v521 = vmul.f32 %v457, 0.5
    %v522 = vmul.f32 %v458, 0.5
    %v523 = vmul.f32 %v459, 0.5
    %v524 = vmul.f32 %v460, 0.5
    %v525 = vmul.f32 %v461, 0.5
    %v526 = vmul.f32 %v462, 0.5
    %v527 = vmul.f32 %v463, 0.5
    %v528 = vmul.f32 %v464, 0.5
    %v529 = vmul.f32 %v465, 0.5
    %v530 = vmul.f32 %v466, 0.5
    %v531 = vmul.f32 %v467, 0.5
    %v532 = vmul.f32 %v468, 0.5
    %v533 = vmul.f32 %v469, 0.5
    %v534 = vmul.f32 %v470, 0.5
    %v535 = vmul.f32 %v471, 0.5
    %v536 = vmul.f32 %v472, 0.5
    %v537 = vmul.f32 %v473, 0.5
    %v538 = vmul.f32 %v474, 0.5
    %v539 = vmul.f32 %v475, 0.5
    %v540 = vmul.f32 %v476, 0.5
    %v541 = vmul.f32 %v477, 0.5
    %v542 = vmul.f32 %v478, 0.5
    %v543 = vmul.f32 %v479, 0.5
    %v544 = vmul.f32 %v480, 0.5
    %v545 = vmul.f32 %v481, 0.5
    %v546 = vmul.f32 %v482, 0.5
    %v547 = vmul.f32 %v483, 0.5
    %v548 = vmul.f32 %v484, 0.5
    %v549 = vmul.f32 %v485, 0.5
    %v550 = vmul.f32 %v486, 0.5
    %v551 = vmul.f32 %v487, 0.5
    %v552 = vmul.f32 %v488, 0.5
    %v553 = vmul.f32 %v489, 0.5
    %v554 = vmul.f32 %v490, 0.5
    %v555 = vadd.f32 %v491, 0.5
    %v556 = vadd.f32 %v492, 0.5
    %v557 = vadd.f32 %v493, 0.5
    %v558 = vadd.f32 %v494, 0.5
    %v559 = vadd.f32 %v495, 0.5
    %v560 = vadd.f32 %v496, 0.5
    %v561 = vadd.f32 %v497, 0.5
    %v562 = vadd.f32 %v498, 0.5
    %v563 = vadd.f32 %v499, 0.5
    %v564 = vadd.f32 %v500, 0.5
    %v565 = vadd.f32 %v501, 0.5
    %v566 = vadd.f32 %v502, 0.5
    %v567 = vadd.f32 %v503, 0.5
    %v568 = vadd.f32 %v504, 0.5
    %v569 = vadd.f32 %v505, 0.5
    %v570 = vadd.f32 %v506, 0.5
    %v571 = vadd.f32 %v507, 0.5
    %v572 = vadd.f32 %v508, 0.5
    %v573 = vadd.f32 %v509, 0.5
    %v574 = vadd.f32 %v510, 0.5
    %v575 = vadd.f32 %v511, 0.5
    %v576 = vadd.f32 %v512, 0.5
    %v577 = vadd.f32 %v513, 0.5
    %v578 = vadd.f32 %v514, 0.5
    %v579 = vadd.f32 %v515, 0.5
    %v580 = vadd.f32 %v516, 0.5
    %v581 = vadd.f32 %v517, 0.5
    %v582 = vadd.f32 %v518, 0.5
    %v583 = vadd.f32 %v519, 0.5
    %v584 = vadd.f32 %v520, 0.5
    %v585 = vadd.f32 %v521, 0.5
    %v586 = vadd.f32 %v522, 0.5
    %v587 = vadd.f32 %v523, 0.5
    %v588 = vadd.f32 %v524, 0.5
    %v589 = vadd.f32 %v525, 0.5
    %v590 = vadd.f32 %v526, 0.5
    %v591 = vadd.f32 %v527, 0.5
    %v592 = vadd.f32 %v528, 0.5
    %v593 = vadd.f32 %v529, 0.5
    %v594 = vadd.f32 %v530, 0.5
    %v595 = vadd.f32 %v531, 0.5
    %v596 = vadd.f32 %v532, 0.5
    %v597 = vadd.f32 %v533, 0.5
    %v598 = vadd.f32 %v534, 0.5
    %v599 = vadd.f32 %v535, 0.5
    %v600 = vadd.f32 %v536, 0.5
    %v601 = vadd.f32 %v537, 0.5
    %v602 = vadd.f32 %v538, 0.5
    %v603 = vadd.f32 %v539, 0.5
    %v604 = vadd.f32 %v540, 0.5
    %v605 = vadd.f32 %v541, 0.5
    %v606 = vadd.f32 %v542, 0.5
    %v607 = vadd.f32 %v543, 0.5
    %v608 = vadd.f32 %v544, 0.5
    %v609 = vadd.f32 %v545, 0.5
    %v610 = vadd.f32 %v546, 0.5
    %v611 = vadd.f32 %v547, 0.5
    %v612 = vadd.f32 %v548, 0.5
    %v613 = vadd.f32 %v549, 0.5
    %v614 = vadd.f32 %v550, 0.5
    %v615 = vadd.f32 %v551, 0.5
    %v616 = vadd.f32 %v552, 0.5
    %v617 = vadd.f32 %v553, 0.5
    %v618 = vadd.f32 %v554, 0.5
    %619 = vst [vmem:[#allocation7] sm:$0xff] %v555
    %620 = vst [vmem:[#allocation7 + $0x8] sm:$0xff] %v556
    %621 = vst [vmem:[#allocation7 + $0x10] sm:$0xff] %v557
    %622 = vst [vmem:[#allocation7 + $0x18] sm:$0xff] %v558
    %623 = vst [vmem:[#allocation7 + $0x20] sm:$0xff] %v559
    %624 = vst [vmem:[#allocation7 + $0x28] sm:$0xff] %v560
    %625 = vst [vmem:[#allocation7 + $0x30] sm:$0xff] %v561
    %626 = vst [vmem:[#allocation7 + $0x38] sm:$0xff] %v562
    %627 = vst [vmem:[#allocation7 + $0x40] sm:$0xff] %v563
    %628 = vst [vmem:[#allocation7 + $0x48] sm:$0xff] %v564
    %629 = vst [vmem:[#allocation7 + $0x50] sm:$0xff] %v565
    %630 = vst [vmem:[#allocation7 + $0x58] sm:$0xff] %v566
    %631 = vst [vmem:[#allocation7 + $0x60] sm:$0xff] %v567
    %632 = vst [vmem:[#allocation7 + $0x68] sm:$0xff] %v568
    %633 = vst [vmem:[#allocation7 + $0x70] sm:$0xff] %v569
    %634 = vst [vmem:[#allocation7 + $0x78] sm:$0xff] %v570
    %635 = vst [vmem:[#allocation7 + $0x80] sm:$0xff] %v571
    %636 = vst [vmem:[#allocation7 + $0x88] sm:$0xff] %v572
    %637 = vst [vmem:[#allocation7 + $0x90] sm:$0xff] %v573
    %638 = vst [vmem:[#allocation7 + $0x98] sm:$0xff] %v574
    %639 = vst [vmem:[#allocation7 + $0xa0] sm:$0xff] %v575
    %640 = vst [vmem:[#allocation7 + $0xa8] sm:$0xff] %v576
    %641 = vst [vmem:[#allocation7 + $0xb0] sm:$0xff] %v577
    %642 = vst [vmem:[#allocation7 + $0xb8] sm:$0xff] %v578
    %643 = vst [vmem:[#allocation7 + $0xc0] sm:$0xff] %v579
    %644 = vst [vmem:[#allocation7 + $0xc8] sm:$0xff] %v580
    %645 = vst [vmem:[#allocation7 + $0xd0] sm:$0xff] %v581
    %646 = vst [vmem:[#allocation7 + $0xd8] sm:$0xff] %v582
    %647 = vst [vmem:[#allocation7 + $0xe0] sm:$0xff] %v583
    %648 = vst [vmem:[#allocation7 + $0xe8] sm:$0xff] %v584
    %649 = vst [vmem:[#allocation7 + $0xf0] sm:$0xff] %v585
    %650 = vst [vmem:[#allocation7 + $0xf8] sm:$0xff] %v586
    %651 = vst [vmem:[#allocation7 + $0x100] sm:$0xff] %v587
    %652 = vst [vmem:[#allocation7 + $0x108] sm:$0xff] %v588
    %653 = vst [vmem:[#allocation7 + $0x110] sm:$0xff] %v589
    %654 = vst [vmem:[#allocation7 + $0x118] sm:$0xff] %v590
    %655 = vst [vmem:[#allocation7 + $0x120] sm:$0xff] %v591
    %656 = vst [vmem:[#allocation7 + $0x128] sm:$0xff] %v592
    %657 = vst [vmem:[#allocation7 + $0x130] sm:$0xff] %v593
    %658 = vst [vmem:[#allocation7 + $0x138] sm:$0xff] %v594
    %659 = vst [vmem:[#allocation7 + $0x140] sm:$0xff] %v595
    %660 = vst [vmem:[#allocation7 + $0x148] sm:$0xff] %v596
    %661 = vst [vmem:[#allocation7 + $0x150] sm:$0xff] %v597
    %662 = vst [vmem:[#allocation7 + $0x158] sm:$0xff] %v598
    %663 = vst [vmem:[#allocation7 + $0x160] sm:$0xff] %v599
    %664 = vst [vmem:[#allocation7 + $0x168] sm:$0xff] %v600
    %665 = vst [vmem:[#allocation7 + $0x170] sm:$0xff] %v601
    %666 = vst [vmem:[#allocation7 + $0x178] sm:$0xff] %v602
    %667 = vst [vmem:[#allocation7 + $0x180] sm:$0xff] %v603
    %668 = vst [vmem:[#allocation7 + $0x188] sm:$0xff] %v604
    %669 = vst [vmem:[#allocation7 + $0x190] sm:$0xff] %v605
    %670 = vst [vmem:[#allocation7 + $0x198] sm:$0xff] %v606
    %671 = vst [vmem:[#allocation7 + $0x1a0] sm:$0xff] %v607
    %672 = vst [vmem:[#allocation7 + $0x1a8] sm:$0xff] %v608
    %673 = vst [vmem:[#allocation7 + $0x1b0] sm:$0xff] %v609
    %674 = vst [vmem:[#allocation7 + $0x1b8] sm:$0xff] %v610
    %675 = vst [vmem:[#allocation7 + $0x1c0] sm:$0xff] %v611
    %676 = vst [vmem:[#allocation7 + $0x1c8] sm:$0xff] %v612
    %677 = vst [vmem:[#allocation7 + $0x1d0] sm:$0xff] %v613
    %678 = vst [vmem:[#allocation7 + $0x1d8] sm:$0xff] %v614
    %679 = vst [vmem:[#allocation7 + $0x1e0] sm:$0xff] %v615
    %680 = vst [vmem:[#allocation7 + $0x1e8] sm:$0xff] %v616
    %681 = vst [vmem:[#allocation7 + $0x1f0] sm:$0xff] %v617
    %682 = vst [vmem:[#allocation7 + $0x1f8] sm:$0xff] %v618
    // Predicated region
    $region18: #{tpu_custom_call.1} parent=1 // pred_check
      _
    $region19: #{tpu_custom_call.1} parent=1 // pred_check_branch
      %684 = sbr.rel (0) target = $region21
    $region20: #{tpu_custom_call.1} parent=1 // pred_region
      %s686 = ssub.s32 8192, 8192
      %687 = vsyncadd [#allocation4], %s686
      %s688 = sshll.u32 [#allocation7], 4
      %s689 = int_to_ptr.vmem [resolvable:$true] %s688
      %694 = dma.vmem_to_hbm [thread:$0]  %s689, 8192, %s2, [#allocation4], 256, 256, 16
    $region21: #{tpu_custom_call.1} parent=1 // pred_fallthru
      _
    // Predicated region
    $region22: #{tpu_custom_call.1} parent=1 // pred_check
      _
    $region23: #{tpu_custom_call.1} parent=1 // pred_check_branch
      %696 = sbr.rel (0) target = $region25
    $region24: #{tpu_custom_call.1} parent=1 // pred_region
      %697 = dma.done [#allocation4], 8192
    $region25: #{tpu_custom_call.1} parent=1 // pred_fallthru
      _
    %698 = vsyncpa [#allocation3], 1
    %699 = vsyncpa [#allocation6], 1
    %700 = vsyncpa [#allocation4], 1

</llo_original>
